<compile_context>
chip_gen: v7x
topology: tpu7x:2x2x1
jax: 0.10.0
libtpu: 0.0.40
codegen_flags: <defaults>
</compile_context>

<pallas_src>
import functools

import jax
import jax.numpy as jnp
from jax import lax
from jax.experimental import pallas as pl
from jax.experimental.pallas import tpu as pltpu


def transformer_block_kernel(qh_ref, kh_ref, vh_ref, qres_ref, mask_ref,
                             wout_ref,
                             g1_ref, b1_ref,
                             w1_ref, bb1_ref, w2_ref, bb2_ref,
                             g2_ref, b2_ref,
                             o_ref, *, emb_size, eps=1e-5):
    # One grid step = (one batch element, one query block).
    # qh: (H, TQ, D) bf16   kh/vh: (H, S, D) bf16   qres: (TQ, E) f32   mask: (TQ, S) i32
    scale = 1.0 / (float(emb_size) ** 0.5)   # reference divides by sqrt(emb_size)

    # --- batched multi-head attention: bf16 MXU operands, f32 accumulation ---
    q = qh_ref[...] * scale                  # scale applied once to q (stays bf16)
    k = kh_ref[...]
    v = vh_ref[...]

    energy = jnp.einsum('hqd,hkd->hqk', q, k,
                        preferred_element_type=jnp.float32)          # (H, TQ, S) f32

    masked = (mask_ref[...] == 0)            # int mask: 0 == masked out
    fill = jnp.float32(-1e20) * scale        # == masked_fill(-1e20) then /sqrt(E)
    energy = jnp.where(masked[None, :, :], fill, energy)

    m = jnp.max(energy, axis=-1, keepdims=True)
    p = jnp.exp(energy - m)
    denom = jnp.sum(p, axis=-1, keepdims=True)
    att = p * pl.reciprocal(denom, approx=True)                      # softmax (f32)

    ctx = jnp.einsum('hqk,hkd->hqd', att.astype(jnp.bfloat16), v,
                     preferred_element_type=jnp.float32)             # (H, TQ, D) f32

    # fc_out folded over heads: per-head projection into E, then sum over heads.
    # Mathematically identical to concat-heads @ wout, but no lane-axis concat.
    partial = jnp.einsum('hqd,hde->hqe', ctx.astype(jnp.bfloat16), wout_ref[...],
                         preferred_element_type=jnp.float32)         # (H, TQ, E) f32
    attn = jnp.sum(partial, axis=0)                                  # (TQ, E) f32

    def layernorm(x, g, b):                  # f32 VPU math, biased variance
        mu = jnp.mean(x, axis=-1, keepdims=True)
        var = jnp.mean((x - mu) ** 2, axis=-1, keepdims=True)
        return (x - mu) * lax.rsqrt(var + eps) * g + b

    # TODO(synk): dropout omitted (identity in eval / inference mode).
    mid = layernorm(qres_ref[...].astype(jnp.float32) + attn,
                    g1_ref[...], b1_ref[...])                        # norm1(query + attn)

    # --- feed-forward (bf16 MXU operands, f32 accumulation / bias / ReLU) ---
    h1 = jnp.dot(mid.astype(jnp.bfloat16), w1_ref[...],
                 preferred_element_type=jnp.float32) + bb1_ref[...]
    h1 = jnp.maximum(h1, 0.0)
    ff = jnp.dot(h1.astype(jnp.bfloat16), w2_ref[...],
                 preferred_element_type=jnp.float32) + bb2_ref[...]

    out = layernorm(mid + ff, g2_ref[...], b2_ref[...])              # norm2(mid + ff)
    o_ref[...] = out.astype(o_ref.dtype)


def transformer_block(value, key, query, mask, params, *, heads, q_block=128):
    N, S, E = query.shape
    D = E // heads
    assert D * heads == E
    FE = params["w1"].shape[1]
    TQ = min(q_block, S)
    assert S % TQ == 0

    # Split heads in the wrapper: (N, S, E) -> (N, H, S, D), bf16 for the MXU.
    def to_heads(x):
        return jnp.transpose(x.reshape(N, S, heads, D), (0, 2, 1, 3)).astype(jnp.bfloat16)

    q_h, k_h, v_h = to_heads(query), to_heads(key), to_heads(value)
    wout_r = params["wout"].reshape(heads, D, E).astype(jnp.bfloat16)  # (H, D, E)
    w1 = params["w1"].astype(jnp.bfloat16)
    w2 = params["w2"].astype(jnp.bfloat16)
    mask_i = (mask != 0).astype(jnp.int32)   # 0 == masked out; no float equality in-kernel

    kern = functools.partial(transformer_block_kernel, emb_size=E)

    qh_spec = pl.BlockSpec((None, heads, TQ, D), lambda n, qi: (n, 0, qi, 0))
    kv_spec = pl.BlockSpec((None, heads, S, D), lambda n, qi: (n, 0, 0, 0))
    qres_spec = pl.BlockSpec((None, TQ, E), lambda n, qi: (n, qi, 0))
    mask_spec = pl.BlockSpec((None, TQ, S), lambda n, qi: (n, qi, 0))

    def w_spec(shape):
        return pl.BlockSpec(shape, lambda n, qi, _s=shape: (0,) * len(_s))

    return pl.pallas_call(
        kern,
        out_shape=jax.ShapeDtypeStruct((N, S, E), query.dtype),
        grid=(N, S // TQ),
        in_specs=[qh_spec, kv_spec, kv_spec, qres_spec, mask_spec,
                  w_spec((heads, D, E)),                 # fc_out weight (H, D, E) bf16
                  w_spec((1, E)), w_spec((1, E)),        # layernorm1 gamma/beta
                  w_spec((E, FE)), w_spec((1, FE)),      # ff linear1 W/b
                  w_spec((FE, E)), w_spec((1, E)),       # ff linear2 W/b
                  w_spec((1, E)), w_spec((1, E))],       # layernorm2 gamma/beta
        out_specs=qres_spec,
        compiler_params=pltpu.CompilerParams(
            dimension_semantics=("parallel", "parallel")),
    )(q_h, k_h, v_h, query, mask_i,
      wout_r,
      params["g1"], params["b1"],
      w1, params["bb1"], w2, params["bb2"],
      params["g2"], params["b2"])


if __name__ == "__main__":
    # batch, seq, embed_size, heads, forward_expansion — small but lane-dense (E = 128).
    N, S, E, H, FEXP = 2, 16, 128, 4, 4
    FE = FEXP * E

    root = jax.random.PRNGKey(0)
    ks = jax.random.split(root, 8)

    value = jax.random.normal(ks[0], (N, S, E), jnp.float32)
    key_t = jax.random.normal(ks[1], (N, S, E), jnp.float32)
    query = jax.random.normal(ks[2], (N, S, E), jnp.float32)
    # mask broadcast over heads: (N, S, S); nonzero = attend, 0 = masked (fill -1e20)
    mask = jnp.broadcast_to(jnp.tril(jnp.ones((S, S), jnp.float32)), (N, S, S))

    params = dict(
        wout=0.1 * jax.random.normal(ks[3], (E, E), jnp.float32),
        g1=jnp.ones((1, E), jnp.float32), b1=jnp.zeros((1, E), jnp.float32),
        w1=0.1 * jax.random.normal(ks[4], (E, FE), jnp.float32),
        bb1=0.01 * jax.random.normal(ks[5], (1, FE), jnp.float32),
        w2=0.1 * jax.random.normal(ks[6], (FE, E), jnp.float32),
        bb2=0.01 * jax.random.normal(ks[7], (1, E), jnp.float32),
        g2=jnp.ones((1, E), jnp.float32), b2=jnp.zeros((1, E), jnp.float32),
    )

    out = transformer_block(value, key_t, query, mask, params, heads=H)
    out = jax.block_until_ready(out)
    assert out.shape == (N, S, E) and out.dtype == jnp.float32
    assert bool(jnp.all(jnp.isfinite(out)))
    print("KERNEL_OK")
</pallas_src>

<mosaic_0001>
module attributes {stable_mosaic.version = 11 : i64} {
  func.func @transformer_block_kernel(%arg0: i32, %arg1: i32, %arg2: memref<1x4x16x32xbf16, #tpu.memory_space<vmem>>, %arg3: memref<1x4x16x32xbf16, #tpu.memory_space<vmem>>, %arg4: memref<1x4x16x32xbf16, #tpu.memory_space<vmem>>, %arg5: memref<1x16x128xf32, #tpu.memory_space<vmem>>, %arg6: memref<1x16x16xi32, #tpu.memory_space<vmem>>, %arg7: memref<4x32x128xbf16, #tpu.memory_space<vmem>>, %arg8: memref<1x128xf32, #tpu.memory_space<vmem>>, %arg9: memref<1x128xf32, #tpu.memory_space<vmem>>, %arg10: memref<128x512xbf16, #tpu.memory_space<vmem>>, %arg11: memref<1x512xf32, #tpu.memory_space<vmem>>, %arg12: memref<512x128xbf16, #tpu.memory_space<vmem>>, %arg13: memref<1x128xf32, #tpu.memory_space<vmem>>, %arg14: memref<1x128xf32, #tpu.memory_space<vmem>>, %arg15: memref<1x128xf32, #tpu.memory_space<vmem>>, %arg16: memref<1x16x128xf32, #tpu.memory_space<vmem>>) attributes {dimension_semantics = [#tpu.dimension_semantics<parallel>, #tpu.dimension_semantics<parallel>], iteration_bounds = array<i64: 2, 1>, scalar_prefetch = 0 : i64, scratch_operands = 0 : i64, tpu.core_type = #tpu.core_type<tc>, window_params = [{transform_indices = @transform_0, window_bounds = array<i64: 1, 4, 16, 32>}, {transform_indices = @transform_1, window_bounds = array<i64: 1, 4, 16, 32>}, {transform_indices = @transform_2, window_bounds = array<i64: 1, 4, 16, 32>}, {transform_indices = @transform_3, window_bounds = array<i64: 1, 16, 128>}, {transform_indices = @transform_4, window_bounds = array<i64: 1, 16, 16>}, {pipeline_mode = #tpu.pipeline_mode<synchronous>, transform_indices = @transform_5, window_bounds = array<i64: 4, 32, 128>}, {pipeline_mode = #tpu.pipeline_mode<synchronous>, transform_indices = @transform_6, window_bounds = array<i64: 1, 128>}, {pipeline_mode = #tpu.pipeline_mode<synchronous>, transform_indices = @transform_7, window_bounds = array<i64: 1, 128>}, {pipeline_mode = #tpu.pipeline_mode<synchronous>, transform_indices = @transform_8, window_bounds = array<i64: 128, 512>}, {pipeline_mode = #tpu.pipeline_mode<synchronous>, transform_indices = @transform_9, window_bounds = array<i64: 1, 512>}, {pipeline_mode = #tpu.pipeline_mode<synchronous>, transform_indices = @transform_10, window_bounds = array<i64: 512, 128>}, {pipeline_mode = #tpu.pipeline_mode<synchronous>, transform_indices = @transform_11, window_bounds = array<i64: 1, 128>}, {pipeline_mode = #tpu.pipeline_mode<synchronous>, transform_indices = @transform_12, window_bounds = array<i64: 1, 128>}, {pipeline_mode = #tpu.pipeline_mode<synchronous>, transform_indices = @transform_13, window_bounds = array<i64: 1, 128>}, {transform_indices = @transform_14, window_bounds = array<i64: 1, 16, 128>}]} {
    %c0 = arith.constant 0 : index
    %c0_0 = arith.constant 0 : index
    %c0_1 = arith.constant 0 : index
    %c0_2 = arith.constant 0 : index
    %0 = vector.load %arg2[%c0, %c0_0, %c0_1, %c0_2] : memref<1x4x16x32xbf16, #tpu.memory_space<vmem>>, vector<1x4x16x32xbf16>
    %1 = vector.shape_cast %0 : vector<1x4x16x32xbf16> to vector<4x16x32xbf16>
    %cst = arith.constant 8.837890e-02 : bf16
    %2 = vector.broadcast %cst : bf16 to vector<4x16x32xbf16>
    %3 = arith.mulf %1, %2 : vector<4x16x32xbf16>
    %c0_3 = arith.constant 0 : index
    %c0_4 = arith.constant 0 : index
    %c0_5 = arith.constant 0 : index
    %c0_6 = arith.constant 0 : index
    %4 = vector.load %arg3[%c0_3, %c0_4, %c0_5, %c0_6] : memref<1x4x16x32xbf16, #tpu.memory_space<vmem>>, vector<1x4x16x32xbf16>
    %5 = vector.shape_cast %4 : vector<1x4x16x32xbf16> to vector<4x16x32xbf16>
    %c0_7 = arith.constant 0 : index
    %c0_8 = arith.constant 0 : index
    %c0_9 = arith.constant 0 : index
    %c0_10 = arith.constant 0 : index
    %6 = vector.load %arg4[%c0_7, %c0_8, %c0_9, %c0_10] : memref<1x4x16x32xbf16, #tpu.memory_space<vmem>>, vector<1x4x16x32xbf16>
    %7 = vector.shape_cast %6 : vector<1x4x16x32xbf16> to vector<4x16x32xbf16>
    "tpu.trace_start"() <{level = 10 : i32, message = "hqd,hkd->hqk"}> : () -> ()
    %cst_11 = arith.constant dense<0.000000e+00> : vector<4x16x16xf32>
    %8 = tpu.matmul %3, %5, %cst_11 {dimension_numbers = #tpu.dot_dimension_numbers<[2], [2], [1], [1], [0, 0, 0, 1, 1, 1], [0], [0]>} : vector<4x16x32xbf16>, vector<4x16x32xbf16>, vector<4x16x16xf32> -> vector<4x16x16xf32>
    "tpu.trace_stop"() : () -> ()
    %c0_12 = arith.constant 0 : index
    %c0_13 = arith.constant 0 : index
    %c0_14 = arith.constant 0 : index
    %9 = vector.load %arg6[%c0_12, %c0_13, %c0_14] : memref<1x16x16xi32, #tpu.memory_space<vmem>>, vector<1x16x16xi32>
    %10 = vector.shape_cast %9 : vector<1x16x16xi32> to vector<16x16xi32>
    %c0_i32 = arith.constant 0 : i32
    %11 = vector.broadcast %c0_i32 : i32 to vector<16x16xi32>
    %12 = arith.cmpi eq, %10, %11 : vector<16x16xi32>
    %cst_15 = arith.constant -1.000000e+20 : f32
    %cst_16 = arith.constant 0.0883883461 : f32
    %13 = arith.mulf %cst_15, %cst_16 : f32
    %14 = vector.shape_cast %12 : vector<16x16xi1> to vector<1x16x16xi1>
    %15 = vector.shape_cast %14 : vector<1x16x16xi1> to vector<1x16x16xi1>
    %16 = vector.broadcast %15 : vector<1x16x16xi1> to vector<4x16x16xi1>
    %17 = vector.broadcast %13 : f32 to vector<4x16x16xf32>
    %18 = arith.select %16, %17, %8 : vector<4x16x16xi1>, vector<4x16x16xf32>
    %cst_17 = arith.constant dense<0xFF800000> : vector<4x16xf32>
    %19 = vector.multi_reduction <maximumf>, %18, %cst_17 [2] : vector<4x16x16xf32> to vector<4x16xf32>
    %20 = vector.shape_cast %19 : vector<4x16xf32> to vector<4x16x1xf32>
    %21 = vector.broadcast %20 : vector<4x16x1xf32> to vector<4x16x16xf32>
    %22 = arith.subf %18, %21 : vector<4x16x16xf32>
    %23 = math.exp %22 : vector<4x16x16xf32>
    %cst_18 = arith.constant dense<0.000000e+00> : vector<4x16xf32>
    %24 = vector.multi_reduction <add>, %23, %cst_18 [2] : vector<4x16x16xf32> to vector<4x16xf32>
    %25 = vector.shape_cast %24 : vector<4x16xf32> to vector<4x16x1xf32>
    %26 = tpu.reciprocal %25 {approx = true} : vector<4x16x1xf32> -> vector<4x16x1xf32>
    %27 = vector.broadcast %26 : vector<4x16x1xf32> to vector<4x16x16xf32>
    %28 = arith.mulf %23, %27 : vector<4x16x16xf32>
    %29 = arith.truncf %28 : vector<4x16x16xf32> to vector<4x16x16xbf16>
    "tpu.trace_start"() <{level = 10 : i32, message = "hqk,hkd->hqd"}> : () -> ()
    %cst_19 = arith.constant dense<0.000000e+00> : vector<4x16x32xf32>
    %30 = tpu.matmul %29, %7, %cst_19 {dimension_numbers = #tpu.dot_dimension_numbers<[2], [1], [1], [2], [0, 0, 0, 1, 1, 2], [0], [0]>} : vector<4x16x16xbf16>, vector<4x16x32xbf16>, vector<4x16x32xf32> -> vector<4x16x32xf32>
    "tpu.trace_stop"() : () -> ()
    %31 = arith.truncf %30 : vector<4x16x32xf32> to vector<4x16x32xbf16>
    %c0_20 = arith.constant 0 : index
    %c0_21 = arith.constant 0 : index
    %c0_22 = arith.constant 0 : index
    %32 = vector.load %arg7[%c0_20, %c0_21, %c0_22] : memref<4x32x128xbf16, #tpu.memory_space<vmem>>, vector<4x32x128xbf16>
    "tpu.trace_start"() <{level = 10 : i32, message = "hqd,hde->hqe"}> : () -> ()
    %cst_23 = arith.constant dense<0.000000e+00> : vector<4x16x128xf32>
    %33 = tpu.matmul %31, %32, %cst_23 {dimension_numbers = #tpu.dot_dimension_numbers<[2], [1], [1], [2], [0, 0, 0, 1, 1, 2], [0], [0]>} : vector<4x16x32xbf16>, vector<4x32x128xbf16>, vector<4x16x128xf32> -> vector<4x16x128xf32>
    "tpu.trace_stop"() : () -> ()
    %cst_24 = arith.constant dense<0.000000e+00> : vector<16x128xf32>
    %34 = vector.multi_reduction <add>, %33, %cst_24 [0] : vector<4x16x128xf32> to vector<16x128xf32>
    %c0_25 = arith.constant 0 : index
    %c0_26 = arith.constant 0 : index
    %c0_27 = arith.constant 0 : index
    %35 = vector.load %arg5[%c0_25, %c0_26, %c0_27] : memref<1x16x128xf32, #tpu.memory_space<vmem>>, vector<1x16x128xf32>
    %36 = vector.shape_cast %35 : vector<1x16x128xf32> to vector<16x128xf32>
    %37 = arith.addf %36, %34 : vector<16x128xf32>
    %c0_28 = arith.constant 0 : index
    %c0_29 = arith.constant 0 : index
    %38 = vector.load %arg8[%c0_28, %c0_29] : memref<1x128xf32, #tpu.memory_space<vmem>>, vector<1x128xf32>
    %c0_30 = arith.constant 0 : index
    %c0_31 = arith.constant 0 : index
    %39 = vector.load %arg9[%c0_30, %c0_31] : memref<1x128xf32, #tpu.memory_space<vmem>>, vector<1x128xf32>
    %cst_32 = arith.constant dense<0.000000e+00> : vector<16xf32>
    %40 = vector.multi_reduction <add>, %37, %cst_32 [1] : vector<16x128xf32> to vector<16xf32>
    %41 = vector.shape_cast %40 : vector<16xf32> to vector<16x1xf32>
    %cst_33 = arith.constant 1.280000e+02 : f32
    %42 = vector.broadcast %cst_33 : f32 to vector<16x1xf32>
    %43 = arith.divf %41, %42 : vector<16x1xf32>
    %44 = vector.broadcast %43 : vector<16x1xf32> to vector<16x128xf32>
    %45 = arith.subf %37, %44 : vector<16x128xf32>
    %46 = arith.mulf %45, %45 : vector<16x128xf32>
    %cst_34 = arith.constant dense<0.000000e+00> : vector<16xf32>
    %47 = vector.multi_reduction <add>, %46, %cst_34 [1] : vector<16x128xf32> to vector<16xf32>
    %48 = vector.shape_cast %47 : vector<16xf32> to vector<16x1xf32>
    %cst_35 = arith.constant 1.280000e+02 : f32
    %49 = vector.broadcast %cst_35 : f32 to vector<16x1xf32>
    %50 = arith.divf %48, %49 : vector<16x1xf32>
    %51 = vector.broadcast %43 : vector<16x1xf32> to vector<16x128xf32>
    %52 = arith.subf %37, %51 : vector<16x128xf32>
    %cst_36 = arith.constant 9.99999974E-6 : f32
    %53 = vector.broadcast %cst_36 : f32 to vector<16x1xf32>
    %54 = arith.addf %50, %53 : vector<16x1xf32>
    %55 = math.rsqrt %54 : vector<16x1xf32>
    %56 = vector.broadcast %55 : vector<16x1xf32> to vector<16x128xf32>
    %57 = arith.mulf %52, %56 : vector<16x128xf32>
    %58 = vector.broadcast %38 : vector<1x128xf32> to vector<16x128xf32>
    %59 = arith.mulf %57, %58 : vector<16x128xf32>
    %60 = vector.broadcast %39 : vector<1x128xf32> to vector<16x128xf32>
    %61 = arith.addf %59, %60 : vector<16x128xf32>
    %62 = arith.truncf %61 : vector<16x128xf32> to vector<16x128xbf16>
    %c0_37 = arith.constant 0 : index
    %c0_38 = arith.constant 0 : index
    %63 = vector.load %arg10[%c0_37, %c0_38] : memref<128x512xbf16, #tpu.memory_space<vmem>>, vector<128x512xbf16>
    %cst_39 = arith.constant dense<0.000000e+00> : vector<16x512xf32>
    %64 = tpu.matmul %62, %63, %cst_39 {dimension_numbers = #tpu.dot_dimension_numbers<[1], [0], [0], [1], [0, 0, 1, 1], [], []>} : vector<16x128xbf16>, vector<128x512xbf16>, vector<16x512xf32> -> vector<16x512xf32>
    %c0_40 = arith.constant 0 : index
    %c0_41 = arith.constant 0 : index
    %65 = vector.load %arg11[%c0_40, %c0_41] : memref<1x512xf32, #tpu.memory_space<vmem>>, vector<1x512xf32>
    %66 = vector.broadcast %65 : vector<1x512xf32> to vector<16x512xf32>
    %67 = arith.addf %64, %66 : vector<16x512xf32>
    %cst_42 = arith.constant 0.000000e+00 : f32
    %68 = vector.broadcast %cst_42 : f32 to vector<16x512xf32>
    %69 = arith.maximumf %67, %68 : vector<16x512xf32>
    %70 = arith.truncf %69 : vector<16x512xf32> to vector<16x512xbf16>
    %c0_43 = arith.constant 0 : index
    %c0_44 = arith.constant 0 : index
    %71 = vector.load %arg12[%c0_43, %c0_44] : memref<512x128xbf16, #tpu.memory_space<vmem>>, vector<512x128xbf16>
    %cst_45 = arith.constant dense<0.000000e+00> : vector<16x128xf32>
    %72 = tpu.matmul %70, %71, %cst_45 {dimension_numbers = #tpu.dot_dimension_numbers<[1], [0], [0], [1], [0, 0, 1, 1], [], []>} : vector<16x512xbf16>, vector<512x128xbf16>, vector<16x128xf32> -> vector<16x128xf32>
    %c0_46 = arith.constant 0 : index
    %c0_47 = arith.constant 0 : index
    %73 = vector.load %arg13[%c0_46, %c0_47] : memref<1x128xf32, #tpu.memory_space<vmem>>, vector<1x128xf32>
    %74 = vector.broadcast %73 : vector<1x128xf32> to vector<16x128xf32>
    %75 = arith.addf %72, %74 : vector<16x128xf32>
    %76 = arith.addf %61, %75 : vector<16x128xf32>
    %c0_48 = arith.constant 0 : index
    %c0_49 = arith.constant 0 : index
    %77 = vector.load %arg14[%c0_48, %c0_49] : memref<1x128xf32, #tpu.memory_space<vmem>>, vector<1x128xf32>
    %c0_50 = arith.constant 0 : index
    %c0_51 = arith.constant 0 : index
    %78 = vector.load %arg15[%c0_50, %c0_51] : memref<1x128xf32, #tpu.memory_space<vmem>>, vector<1x128xf32>
    %cst_52 = arith.constant dense<0.000000e+00> : vector<16xf32>
    %79 = vector.multi_reduction <add>, %76, %cst_52 [1] : vector<16x128xf32> to vector<16xf32>
    %80 = vector.shape_cast %79 : vector<16xf32> to vector<16x1xf32>
    %cst_53 = arith.constant 1.280000e+02 : f32
    %81 = vector.broadcast %cst_53 : f32 to vector<16x1xf32>
    %82 = arith.divf %80, %81 : vector<16x1xf32>
    %83 = vector.broadcast %82 : vector<16x1xf32> to vector<16x128xf32>
    %84 = arith.subf %76, %83 : vector<16x128xf32>
    %85 = arith.mulf %84, %84 : vector<16x128xf32>
    %cst_54 = arith.constant dense<0.000000e+00> : vector<16xf32>
    %86 = vector.multi_reduction <add>, %85, %cst_54 [1] : vector<16x128xf32> to vector<16xf32>
    %87 = vector.shape_cast %86 : vector<16xf32> to vector<16x1xf32>
    %cst_55 = arith.constant 1.280000e+02 : f32
    %88 = vector.broadcast %cst_55 : f32 to vector<16x1xf32>
    %89 = arith.divf %87, %88 : vector<16x1xf32>
    %90 = vector.broadcast %82 : vector<16x1xf32> to vector<16x128xf32>
    %91 = arith.subf %76, %90 : vector<16x128xf32>
    %cst_56 = arith.constant 9.99999974E-6 : f32
    %92 = vector.broadcast %cst_56 : f32 to vector<16x1xf32>
    %93 = arith.addf %89, %92 : vector<16x1xf32>
    %94 = math.rsqrt %93 : vector<16x1xf32>
    %95 = vector.broadcast %94 : vector<16x1xf32> to vector<16x128xf32>
    %96 = arith.mulf %91, %95 : vector<16x128xf32>
    %97 = vector.broadcast %77 : vector<1x128xf32> to vector<16x128xf32>
    %98 = arith.mulf %96, %97 : vector<16x128xf32>
    %99 = vector.broadcast %78 : vector<1x128xf32> to vector<16x128xf32>
    %100 = arith.addf %98, %99 : vector<16x128xf32>
    %c0_57 = arith.constant 0 : index
    %c0_58 = arith.constant 0 : index
    %c0_59 = arith.constant 0 : index
    %101 = vector.load %arg16[%c0_57, %c0_58, %c0_59] : memref<1x16x128xf32, #tpu.memory_space<vmem>>, vector<1x16x128xf32>
    %102 = vector.shape_cast %101 : vector<1x16x128xf32> to vector<16x128xf32>
    %103 = vector.shape_cast %100 : vector<16x128xf32> to vector<1x16x128xf32>
    tpu.vector_store %arg16[%c0_57, %c0_58, %c0_59], %103 {strides = array<i32>} : memref<1x16x128xf32, #tpu.memory_space<vmem>>, vector<1x16x128xf32>,
    return
  }
  func.func @transform_0(%arg0: i32, %arg1: i32) -> (i32, i32, i32, i32) {
    %c0_i32 = arith.constant 0 : i32
    %c0_i32_0 = arith.constant 0 : i32
    %c0_i32_1 = arith.constant 0 : i32
    return %arg0, %c0_i32, %arg1, %c0_i32_0 : i32, i32, i32, i32
  }
  func.func @transform_1(%arg0: i32, %arg1: i32) -> (i32, i32, i32, i32) {
    %c0_i32 = arith.constant 0 : i32
    %c0_i32_0 = arith.constant 0 : i32
    %c0_i32_1 = arith.constant 0 : i32
    %c0_i32_2 = arith.constant 0 : i32
    return %arg0, %c0_i32, %c0_i32_0, %c0_i32_1 : i32, i32, i32, i32
  }
  func.func @transform_2(%arg0: i32, %arg1: i32) -> (i32, i32, i32, i32) {
    %c0_i32 = arith.constant 0 : i32
    %c0_i32_0 = arith.constant 0 : i32
    %c0_i32_1 = arith.constant 0 : i32
    %c0_i32_2 = arith.constant 0 : i32
    return %arg0, %c0_i32, %c0_i32_0, %c0_i32_1 : i32, i32, i32, i32
  }
  func.func @transform_3(%arg0: i32, %arg1: i32) -> (i32, i32, i32) {
    %c0_i32 = arith.constant 0 : i32
    %c0_i32_0 = arith.constant 0 : i32
    return %arg0, %arg1, %c0_i32 : i32, i32, i32
  }
  func.func @transform_4(%arg0: i32, %arg1: i32) -> (i32, i32, i32) {
    %c0_i32 = arith.constant 0 : i32
    %c0_i32_0 = arith.constant 0 : i32
    return %arg0, %arg1, %c0_i32 : i32, i32, i32
  }
  func.func @transform_5(%arg0: i32, %arg1: i32) -> (i32, i32, i32) {
    %c0_i32 = arith.constant 0 : i32
    %c0_i32_0 = arith.constant 0 : i32
    %c0_i32_1 = arith.constant 0 : i32
    %c0_i32_2 = arith.constant 0 : i32
    return %c0_i32, %c0_i32_0, %c0_i32_1 : i32, i32, i32
  }
  func.func @transform_6(%arg0: i32, %arg1: i32) -> (i32, i32) {
    %c0_i32 = arith.constant 0 : i32
    %c0_i32_0 = arith.constant 0 : i32
    %c0_i32_1 = arith.constant 0 : i32
    return %c0_i32, %c0_i32_0 : i32, i32
  }
  func.func @transform_7(%arg0: i32, %arg1: i32) -> (i32, i32) {
    %c0_i32 = arith.constant 0 : i32
    %c0_i32_0 = arith.constant 0 : i32
    %c0_i32_1 = arith.constant 0 : i32
    return %c0_i32, %c0_i32_0 : i32, i32
  }
  func.func @transform_8(%arg0: i32, %arg1: i32) -> (i32, i32) {
    %c0_i32 = arith.constant 0 : i32
    %c0_i32_0 = arith.constant 0 : i32
    %c0_i32_1 = arith.constant 0 : i32
    return %c0_i32, %c0_i32_0 : i32, i32
  }
  func.func @transform_9(%arg0: i32, %arg1: i32) -> (i32, i32) {
    %c0_i32 = arith.constant 0 : i32
    %c0_i32_0 = arith.constant 0 : i32
    %c0_i32_1 = arith.constant 0 : i32
    return %c0_i32, %c0_i32_0 : i32, i32
  }
  func.func @transform_10(%arg0: i32, %arg1: i32) -> (i32, i32) {
    %c0_i32 = arith.constant 0 : i32
    %c0_i32_0 = arith.constant 0 : i32
    %c0_i32_1 = arith.constant 0 : i32
    return %c0_i32, %c0_i32_0 : i32, i32
  }
  func.func @transform_11(%arg0: i32, %arg1: i32) -> (i32, i32) {
    %c0_i32 = arith.constant 0 : i32
    %c0_i32_0 = arith.constant 0 : i32
    %c0_i32_1 = arith.constant 0 : i32
    return %c0_i32, %c0_i32_0 : i32, i32
  }
  func.func @transform_12(%arg0: i32, %arg1: i32) -> (i32, i32) {
    %c0_i32 = arith.constant 0 : i32
    %c0_i32_0 = arith.constant 0 : i32
    %c0_i32_1 = arith.constant 0 : i32
    return %c0_i32, %c0_i32_0 : i32, i32
  }
  func.func @transform_13(%arg0: i32, %arg1: i32) -> (i32, i32) {
    %c0_i32 = arith.constant 0 : i32
    %c0_i32_0 = arith.constant 0 : i32
    %c0_i32_1 = arith.constant 0 : i32
    return %c0_i32, %c0_i32_0 : i32, i32
  }
  func.func @transform_14(%arg0: i32, %arg1: i32) -> (i32, i32, i32) {
    %c0_i32 = arith.constant 0 : i32
    %c0_i32_0 = arith.constant 0 : i32
    return %arg0, %arg1, %c0_i32 : i32, i32, i32
  }
}

</mosaic_0001>

<llo_original>
// kernel: tpu_custom_call.1
$region0: #{tpu_custom_call.1}
  #allocation0 [shape = 'u32[]', space=smem, size = 0x4, offset = 0x4, fixed_abs, tag = 'smem constant byte address 0x4 - core index']
  #allocation1 [shape = 'u32[144,128]{1,0:T(1,128)}', space=vmem, size = 0x12000, scoped, tag = 'internal scratch']
  %s0 = inlined_call_operand.hbm [shape: bf16[2,4,16,32], index: 0, kind: input, shape index: {}]
  %s1 = inlined_call_operand.hbm [shape: bf16[2,4,16,32], index: 1, kind: input, shape index: {}]
  %s2 = inlined_call_operand.hbm [shape: bf16[2,4,16,32], index: 2, kind: input, shape index: {}]
  %s3 = inlined_call_operand.hbm [shape: f32[2,16,128], index: 3, kind: input, shape index: {}]
  %s4 = inlined_call_operand.hbm [shape: s32[2,16,16], index: 4, kind: input, shape index: {}]
  %s5 = inlined_call_operand.hbm [shape: bf16[4,32,128], index: 5, kind: input, shape index: {}]
  %s6 = inlined_call_operand.vmem [shape: f32[1,128], index: 6, kind: input, shape index: {}]
  %s7 = inlined_call_operand.vmem [shape: f32[1,128], index: 7, kind: input, shape index: {}]
  %s8 = inlined_call_operand.hbm [shape: bf16[128,512], index: 8, kind: input, shape index: {}]
  %s9 = inlined_call_operand.vmem [shape: f32[1,512], index: 9, kind: input, shape index: {}]
  %s10 = inlined_call_operand.hbm [shape: bf16[512,128], index: 10, kind: input, shape index: {}]
  %s11 = inlined_call_operand.vmem [shape: f32[1,128], index: 11, kind: input, shape index: {}]
  %s12 = inlined_call_operand.vmem [shape: f32[1,128], index: 12, kind: input, shape index: {}]
  %s13 = inlined_call_operand.vmem [shape: f32[1,128], index: 13, kind: input, shape index: {}]
  %s14 = inlined_call_operand.hbm [shape: f32[2,16,128], index: 14, kind: output, shape index: {}]
  %s15 = sld [smem:[#allocation0]]
  $region121: #{tpu_custom_call.1} parent=0
    _
  %s17 = ssub.s32 1, %s15
  %s18 = scalar_select 0, %s17, %s15
  $region1: #{tpu_custom_call.1} parent=0
    #allocation2 [shape = 'u8[32768]{0}', space=vmem, size = 0x8000, scoped, tag = 'input window, operand 0']
    #allocation3 [shape = 's32[2]{0}', space=sflag, size = 0x8, scoped, tag = 'scoped memory for tpu_custom_call.1']
    #allocation4 [shape = 's32[2]{0}', space=sflag, size = 0x8, scoped, tag = 'scoped memory for tpu_custom_call.1']
    #allocation5 [shape = 'u8[32768]{0}', space=vmem, size = 0x8000, scoped, tag = 'input window, operand 1']
    #allocation6 [shape = 's32[2]{0}', space=sflag, size = 0x8, scoped, tag = 'scoped memory for tpu_custom_call.1']
    #allocation7 [shape = 'u8[32768]{0}', space=vmem, size = 0x8000, scoped, tag = 'input window, operand 2']
    #allocation8 [shape = 'u8[16384]{0}', space=vmem, size = 0x4000, scoped, tag = 'input window, operand 3']
    #allocation9 [shape = 's32[2]{0}', space=sflag, size = 0x8, scoped, tag = 'scoped memory for tpu_custom_call.1']
    #allocation10 [shape = 'u8[16384]{0}', space=vmem, size = 0x4000, scoped, tag = 'input window, operand 4']
    #allocation11 [shape = 'u8[32768]{0}', space=vmem, size = 0x8000, scoped, tag = 'input window, operand 5, single buffered']
    #allocation12 [shape = 's32[1]{0}', space=sflag, size = 0x4, scoped, tag = 'scoped memory for tpu_custom_call.1']
    #allocation13 [shape = 'u8[131072]{0}', space=vmem, size = 0x20000, scoped, tag = 'input window, operand 8, single buffered']
    #allocation14 [shape = 'u8[131072]{0}', space=vmem, size = 0x20000, scoped, tag = 'input window, operand 10, single buffered']
    #allocation15 [shape = 's32[1]{0}', space=sflag, size = 0x4, scoped, tag = 'scoped memory for tpu_custom_call.1']
    #allocation16 [shape = 'u8[16384]{0}', space=vmem, size = 0x4000, scoped, tag = 'output window, operand 0']
    %19 = vsyncpa [#allocation3], 0
    %s20 = scalar_lea.sflag [#allocation3], 1
    %21 = vsyncpa %s20, 0
    %22 = vsyncpa [#allocation6], 0
    %s23 = scalar_lea.sflag [#allocation6], 1
    %24 = vsyncpa %s23, 0
    %25 = vsyncpa [#allocation9], 0
    %s26 = scalar_lea.sflag [#allocation9], 1
    %27 = vsyncpa %s26, 0
    %28 = vsyncpa [#allocation12], 0
    %29 = vsyncpa [#allocation15], 0
    %30 = vsyncpa [#allocation4], 0
    %s31 = scalar_lea.sflag [#allocation4], 1
    %32 = vsyncpa %s31, 0
    loop: start=0, step=1, limit=4
    $region2: #{tpu_custom_call.1} parent=1 // loop_pre_header
      _
    $region3: #{tpu_custom_call.1} parent=1 // loop_header
      %s34 = sphi 0, %s38
      %p35 = scmp.ge.s32.totalorder %s34, 4
      %s41 = sphi 0, %s53
      %s42 = sphi 0, %s49
      %s43 = sphi 0, %s41
      %s44 = sphi 0, %s42
      %s45 = sphi 0, %s43
      %s46 = sphi 0, %s44
      %s58 = sphi 0, %s60
      %s61 = sphi 0, %s58
      %s62 = sphi 0, %s61
      %s78 = sphi 0, %s62
      %s84 = sphi 0, %s86
      %s87 = sphi 0, %s84
      %s88 = sphi 0, %s87
      %s104 = sphi 0, %s88
      %s110 = sphi 0, %s112
      %s113 = sphi 0, %s110
      %s114 = sphi 0, %s113
      %s130 = sphi 0, %s114
      %s138 = sphi 0, %s140
      %s141 = sphi 0, %s138
      %s142 = sphi 0, %s141
      %s158 = sphi 0, %s142
      %s166 = sphi 0, %s168
      %s169 = sphi 0, %s166
      %s170 = sphi 0, %s169
      %s186 = sphi 0, %s170
      %s190 = sphi 0, %s190
      %s192 = sphi 0, %s190
      %s193 = sphi 0, %s192
      %s207 = sphi 0, %s193
      %s211 = sphi 0, %s211
      %s213 = sphi 0, %s211
      %s214 = sphi 0, %s213
      %s228 = sphi 0, %s214
      %s232 = sphi 0, %s232
      %s234 = sphi 0, %s232
      %s235 = sphi 0, %s234
      %s249 = sphi 0, %s235
      %s253 = sphi 0, %s253
      %s255 = sphi 0, %s253
      %s256 = sphi 0, %s255
      %s270 = sphi 0, %s256
      %s274 = sphi 0, %s274
      %s276 = sphi 0, %s274
      %s277 = sphi 0, %s276
      %s291 = sphi 0, %s277
      %s295 = sphi 0, %s295
      %s297 = sphi 0, %s295
      %s298 = sphi 0, %s297
      %s312 = sphi 0, %s298
      %s316 = sphi 0, %s316
      %s318 = sphi 0, %s316
      %s319 = sphi 0, %s318
      %s333 = sphi 0, %s319
      %s337 = sphi 0, %s337
      %s339 = sphi 0, %s337
      %s340 = sphi 0, %s339
      %s354 = sphi 0, %s340
      %s358 = sphi 0, %s358
      %s360 = sphi 0, %s358
      %s361 = sphi 0, %s360
      %s375 = sphi 0, %s361
      %s383 = sphi 0, %s385
      %s386 = sphi 0, %s383
      %s387 = sphi 0, %s386
      %s403 = sphi 0, %s387
    $region4: #{tpu_custom_call.1} parent=1 // loop_header_branch
      %37 = sbr.rel (%p35) target = $region8
    $region5: #{tpu_custom_call.1} parent=1 // loop_body
      %s39 = ssub.s32 %s34, 1
      %s40 = ssub.s32 %s34, 2
      %s47 = sadd.s32 1, %s42
      %p48 = scmp.ge.s32.totalorder %s47, 1
      %s49 = scalar_select %p48, 0, %s47
      %s50 = sadd.s32 1, %s41
      %s51 = scalar_select %p48, %s50, %s41
      %p52 = scmp.ge.s32.totalorder %s51, 2
      %s53 = scalar_select %p52, 0, %s51
      %s54 = ssub.s32 %s41, %s53
      %s55 = ssub.s32 %s42, %s49
      %s56 = sor.u32 %s54, %s55
      %p57 = scmp.eq.s32.totalorder %s56, 0
      %s59 = sadd.s32 %s58, 1
      %s60 = scalar_select %p57, %s58, %s59
      %p63 = pneg %p57
      %p64 = scmp.eq.s32.totalorder %s34, 1
      %p65 = por %p63, %p64
      %p66 = scmp.ne.s32.totalorder %s58, %s61
      %p67 = scmp.eq.s32.totalorder %s34, 0
      %p68 = por %p66, %p67
      %p69 = scmp.ne.s32.totalorder %s58, %s61
      %p70 = scmp.eq.s32.totalorder %s39, 1
      %p71 = por %p69, %p70
      %p72 = scmp.ne.s32.totalorder %s61, %s62
      %p73 = scmp.eq.s32.totalorder %s39, 0
      %p74 = por %p72, %p73
      %p75 = scmp.ne.s32.totalorder %s61, %s62
      %p76 = scmp.eq.s32.totalorder %s40, 1
      %p77 = por %p75, %p76
      %p79 = scmp.ne.s32.totalorder %s62, %s78
      %p80 = scmp.eq.s32.totalorder %s40, 0
      %p81 = por %p79, %p80
      %s82 = ssub.s32 %s41, %s53
      %p83 = scmp.eq.s32.totalorder %s82, 0
      %s85 = sadd.s32 %s84, 1
      %s86 = scalar_select %p83, %s84, %s85
      %p89 = pneg %p83
      %p90 = scmp.eq.s32.totalorder %s34, 1
      %p91 = por %p89, %p90
      %p92 = scmp.ne.s32.totalorder %s84, %s87
      %p93 = scmp.eq.s32.totalorder %s34, 0
      %p94 = por %p92, %p93
      %p95 = scmp.ne.s32.totalorder %s84, %s87
      %p96 = scmp.eq.s32.totalorder %s39, 1
      %p97 = por %p95, %p96
      %p98 = scmp.ne.s32.totalorder %s87, %s88
      %p99 = scmp.eq.s32.totalorder %s39, 0
      %p100 = por %p98, %p99
      %p101 = scmp.ne.s32.totalorder %s87, %s88
      %p102 = scmp.eq.s32.totalorder %s40, 1
      %p103 = por %p101, %p102
      %p105 = scmp.ne.s32.totalorder %s88, %s104
      %p106 = scmp.eq.s32.totalorder %s40, 0
      %p107 = por %p105, %p106
      %s108 = ssub.s32 %s41, %s53
      %p109 = scmp.eq.s32.totalorder %s108, 0
      %s111 = sadd.s32 %s110, 1
      %s112 = scalar_select %p109, %s110, %s111
      %p115 = pneg %p109
      %p116 = scmp.eq.s32.totalorder %s34, 1
      %p117 = por %p115, %p116
      %p118 = scmp.ne.s32.totalorder %s110, %s113
      %p119 = scmp.eq.s32.totalorder %s34, 0
      %p120 = por %p118, %p119
      %p121 = scmp.ne.s32.totalorder %s110, %s113
      %p122 = scmp.eq.s32.totalorder %s39, 1
      %p123 = por %p121, %p122
      %p124 = scmp.ne.s32.totalorder %s113, %s114
      %p125 = scmp.eq.s32.totalorder %s39, 0
      %p126 = por %p124, %p125
      %p127 = scmp.ne.s32.totalorder %s113, %s114
      %p128 = scmp.eq.s32.totalorder %s40, 1
      %p129 = por %p127, %p128
      %p131 = scmp.ne.s32.totalorder %s114, %s130
      %p132 = scmp.eq.s32.totalorder %s40, 0
      %p133 = por %p131, %p132
      %s134 = ssub.s32 %s41, %s53
      %s135 = ssub.s32 %s42, %s49
      %s136 = sor.u32 %s134, %s135
      %p137 = scmp.eq.s32.totalorder %s136, 0
      %s139 = sadd.s32 %s138, 1
      %s140 = scalar_select %p137, %s138, %s139
      %p143 = pneg %p137
      %p144 = scmp.eq.s32.totalorder %s34, 1
      %p145 = por %p143, %p144
      %p146 = scmp.ne.s32.totalorder %s138, %s141
      %p147 = scmp.eq.s32.totalorder %s34, 0
      %p148 = por %p146, %p147
      %p149 = scmp.ne.s32.totalorder %s138, %s141
      %p150 = scmp.eq.s32.totalorder %s39, 1
      %p151 = por %p149, %p150
      %p152 = scmp.ne.s32.totalorder %s141, %s142
      %p153 = scmp.eq.s32.totalorder %s39, 0
      %p154 = por %p152, %p153
      %p155 = scmp.ne.s32.totalorder %s141, %s142
      %p156 = scmp.eq.s32.totalorder %s40, 1
      %p157 = por %p155, %p156
      %p159 = scmp.ne.s32.totalorder %s142, %s158
      %p160 = scmp.eq.s32.totalorder %s40, 0
      %p161 = por %p159, %p160
      %s162 = ssub.s32 %s41, %s53
      %s163 = ssub.s32 %s42, %s49
      %s164 = sor.u32 %s162, %s163
      %p165 = scmp.eq.s32.totalorder %s164, 0
      %s167 = sadd.s32 %s166, 1
      %s168 = scalar_select %p165, %s166, %s167
      %p171 = pneg %p165
      %p172 = scmp.eq.s32.totalorder %s34, 1
      %p173 = por %p171, %p172
      %p174 = scmp.ne.s32.totalorder %s166, %s169
      %p175 = scmp.eq.s32.totalorder %s34, 0
      %p176 = por %p174, %p175
      %p177 = scmp.ne.s32.totalorder %s166, %s169
      %p178 = scmp.eq.s32.totalorder %s39, 1
      %p179 = por %p177, %p178
      %p180 = scmp.ne.s32.totalorder %s169, %s170
      %p181 = scmp.eq.s32.totalorder %s39, 0
      %p182 = por %p180, %p181
      %p183 = scmp.ne.s32.totalorder %s169, %s170
      %p184 = scmp.eq.s32.totalorder %s40, 1
      %p185 = por %p183, %p184
      %p187 = scmp.ne.s32.totalorder %s170, %s186
      %p188 = scmp.eq.s32.totalorder %s40, 0
      %p189 = por %p187, %p188
      %s191 = sadd.s32 %s190, 1
      %p194 = scmp.eq.s32.totalorder %s34, 1
      %p195 = scmp.ne.s32.totalorder %s190, %s192
      %p196 = scmp.eq.s32.totalorder %s34, 0
      %p197 = por %p195, %p196
      %p198 = scmp.ne.s32.totalorder %s190, %s192
      %p199 = scmp.eq.s32.totalorder %s39, 1
      %p200 = por %p198, %p199
      %p201 = scmp.ne.s32.totalorder %s192, %s193
      %p202 = scmp.eq.s32.totalorder %s39, 0
      %p203 = por %p201, %p202
      %p204 = scmp.ne.s32.totalorder %s192, %s193
      %p205 = scmp.eq.s32.totalorder %s40, 1
      %p206 = por %p204, %p205
      %p208 = scmp.ne.s32.totalorder %s193, %s207
      %p209 = scmp.eq.s32.totalorder %s40, 0
      %p210 = por %p208, %p209
      %s212 = sadd.s32 %s211, 1
      %p215 = scmp.eq.s32.totalorder %s34, 1
      %p216 = scmp.ne.s32.totalorder %s211, %s213
      %p217 = scmp.eq.s32.totalorder %s34, 0
      %p218 = por %p216, %p217
      %p219 = scmp.ne.s32.totalorder %s211, %s213
      %p220 = scmp.eq.s32.totalorder %s39, 1
      %p221 = por %p219, %p220
      %p222 = scmp.ne.s32.totalorder %s213, %s214
      %p223 = scmp.eq.s32.totalorder %s39, 0
      %p224 = por %p222, %p223
      %p225 = scmp.ne.s32.totalorder %s213, %s214
      %p226 = scmp.eq.s32.totalorder %s40, 1
      %p227 = por %p225, %p226
      %p229 = scmp.ne.s32.totalorder %s214, %s228
      %p230 = scmp.eq.s32.totalorder %s40, 0
      %p231 = por %p229, %p230
      %s233 = sadd.s32 %s232, 1
      %p236 = scmp.eq.s32.totalorder %s34, 1
      %p237 = scmp.ne.s32.totalorder %s232, %s234
      %p238 = scmp.eq.s32.totalorder %s34, 0
      %p239 = por %p237, %p238
      %p240 = scmp.ne.s32.totalorder %s232, %s234
      %p241 = scmp.eq.s32.totalorder %s39, 1
      %p242 = por %p240, %p241
      %p243 = scmp.ne.s32.totalorder %s234, %s235
      %p244 = scmp.eq.s32.totalorder %s39, 0
      %p245 = por %p243, %p244
      %p246 = scmp.ne.s32.totalorder %s234, %s235
      %p247 = scmp.eq.s32.totalorder %s40, 1
      %p248 = por %p246, %p247
      %p250 = scmp.ne.s32.totalorder %s235, %s249
      %p251 = scmp.eq.s32.totalorder %s40, 0
      %p252 = por %p250, %p251
      %s254 = sadd.s32 %s253, 1
      %p257 = scmp.eq.s32.totalorder %s34, 1
      %p258 = scmp.ne.s32.totalorder %s253, %s255
      %p259 = scmp.eq.s32.totalorder %s34, 0
      %p260 = por %p258, %p259
      %p261 = scmp.ne.s32.totalorder %s253, %s255
      %p262 = scmp.eq.s32.totalorder %s39, 1
      %p263 = por %p261, %p262
      %p264 = scmp.ne.s32.totalorder %s255, %s256
      %p265 = scmp.eq.s32.totalorder %s39, 0
      %p266 = por %p264, %p265
      %p267 = scmp.ne.s32.totalorder %s255, %s256
      %p268 = scmp.eq.s32.totalorder %s40, 1
      %p269 = por %p267, %p268
      %p271 = scmp.ne.s32.totalorder %s256, %s270
      %p272 = scmp.eq.s32.totalorder %s40, 0
      %p273 = por %p271, %p272
      %s275 = sadd.s32 %s274, 1
      %p278 = scmp.eq.s32.totalorder %s34, 1
      %p279 = scmp.ne.s32.totalorder %s274, %s276
      %p280 = scmp.eq.s32.totalorder %s34, 0
      %p281 = por %p279, %p280
      %p282 = scmp.ne.s32.totalorder %s274, %s276
      %p283 = scmp.eq.s32.totalorder %s39, 1
      %p284 = por %p282, %p283
      %p285 = scmp.ne.s32.totalorder %s276, %s277
      %p286 = scmp.eq.s32.totalorder %s39, 0
      %p287 = por %p285, %p286
      %p288 = scmp.ne.s32.totalorder %s276, %s277
      %p289 = scmp.eq.s32.totalorder %s40, 1
      %p290 = por %p288, %p289
      %p292 = scmp.ne.s32.totalorder %s277, %s291
      %p293 = scmp.eq.s32.totalorder %s40, 0
      %p294 = por %p292, %p293
      %s296 = sadd.s32 %s295, 1
      %p299 = scmp.eq.s32.totalorder %s34, 1
      %p300 = scmp.ne.s32.totalorder %s295, %s297
      %p301 = scmp.eq.s32.totalorder %s34, 0
      %p302 = por %p300, %p301
      %p303 = scmp.ne.s32.totalorder %s295, %s297
      %p304 = scmp.eq.s32.totalorder %s39, 1
      %p305 = por %p303, %p304
      %p306 = scmp.ne.s32.totalorder %s297, %s298
      %p307 = scmp.eq.s32.totalorder %s39, 0
      %p308 = por %p306, %p307
      %p309 = scmp.ne.s32.totalorder %s297, %s298
      %p310 = scmp.eq.s32.totalorder %s40, 1
      %p311 = por %p309, %p310
      %p313 = scmp.ne.s32.totalorder %s298, %s312
      %p314 = scmp.eq.s32.totalorder %s40, 0
      %p315 = por %p313, %p314
      %s317 = sadd.s32 %s316, 1
      %p320 = scmp.eq.s32.totalorder %s34, 1
      %p321 = scmp.ne.s32.totalorder %s316, %s318
      %p322 = scmp.eq.s32.totalorder %s34, 0
      %p323 = por %p321, %p322
      %p324 = scmp.ne.s32.totalorder %s316, %s318
      %p325 = scmp.eq.s32.totalorder %s39, 1
      %p326 = por %p324, %p325
      %p327 = scmp.ne.s32.totalorder %s318, %s319
      %p328 = scmp.eq.s32.totalorder %s39, 0
      %p329 = por %p327, %p328
      %p330 = scmp.ne.s32.totalorder %s318, %s319
      %p331 = scmp.eq.s32.totalorder %s40, 1
      %p332 = por %p330, %p331
      %p334 = scmp.ne.s32.totalorder %s319, %s333
      %p335 = scmp.eq.s32.totalorder %s40, 0
      %p336 = por %p334, %p335
      %s338 = sadd.s32 %s337, 1
      %p341 = scmp.eq.s32.totalorder %s34, 1
      %p342 = scmp.ne.s32.totalorder %s337, %s339
      %p343 = scmp.eq.s32.totalorder %s34, 0
      %p344 = por %p342, %p343
      %p345 = scmp.ne.s32.totalorder %s337, %s339
      %p346 = scmp.eq.s32.totalorder %s39, 1
      %p347 = por %p345, %p346
      %p348 = scmp.ne.s32.totalorder %s339, %s340
      %p349 = scmp.eq.s32.totalorder %s39, 0
      %p350 = por %p348, %p349
      %p351 = scmp.ne.s32.totalorder %s339, %s340
      %p352 = scmp.eq.s32.totalorder %s40, 1
      %p353 = por %p351, %p352
      %p355 = scmp.ne.s32.totalorder %s340, %s354
      %p356 = scmp.eq.s32.totalorder %s40, 0
      %p357 = por %p355, %p356
      %s359 = sadd.s32 %s358, 1
      %p362 = scmp.eq.s32.totalorder %s34, 1
      %p363 = scmp.ne.s32.totalorder %s358, %s360
      %p364 = scmp.eq.s32.totalorder %s34, 0
      %p365 = por %p363, %p364
      %p366 = scmp.ne.s32.totalorder %s358, %s360
      %p367 = scmp.eq.s32.totalorder %s39, 1
      %p368 = por %p366, %p367
      %p369 = scmp.ne.s32.totalorder %s360, %s361
      %p370 = scmp.eq.s32.totalorder %s39, 0
      %p371 = por %p369, %p370
      %p372 = scmp.ne.s32.totalorder %s360, %s361
      %p373 = scmp.eq.s32.totalorder %s40, 1
      %p374 = por %p372, %p373
      %p376 = scmp.ne.s32.totalorder %s361, %s375
      %p377 = scmp.eq.s32.totalorder %s40, 0
      %p378 = por %p376, %p377
      %s379 = ssub.s32 %s41, %s53
      %s380 = ssub.s32 %s42, %s49
      %s381 = sor.u32 %s379, %s380
      %p382 = scmp.eq.s32.totalorder %s381, 0
      %s384 = sadd.s32 %s383, 1
      %s385 = scalar_select %p382, %s383, %s384
      %p388 = pneg %p382
      %p389 = scmp.eq.s32.totalorder %s34, 1
      %p390 = por %p388, %p389
      %p391 = scmp.ne.s32.totalorder %s383, %s386
      %p392 = scmp.eq.s32.totalorder %s34, 0
      %p393 = por %p391, %p392
      %p394 = scmp.ne.s32.totalorder %s383, %s386
      %p395 = scmp.eq.s32.totalorder %s39, 1
      %p396 = por %p394, %p395
      %p397 = scmp.ne.s32.totalorder %s386, %s387
      %p398 = scmp.eq.s32.totalorder %s39, 0
      %p399 = por %p397, %p398
      %p400 = scmp.ne.s32.totalorder %s386, %s387
      %p401 = scmp.eq.s32.totalorder %s40, 1
      %p402 = por %p400, %p401
      %p404 = scmp.ne.s32.totalorder %s387, %s403
      %p405 = scmp.eq.s32.totalorder %s40, 0
      %p406 = por %p404, %p405
      %p407 = scmp.le.s32.totalorder 1, %s34
      %p408 = scmp.lt.s32.totalorder %s34, 3
      %p409 = pnand %p407, %p408
      %p410 = pneg %p409
      // Predicated region
      $region9: #{tpu_custom_call.1} parent=5 // pred_check
        _
      $region10: #{tpu_custom_call.1} parent=5 // pred_check_branch
        %412 = sbr.rel (%p409) target = $region12
      $region11: #{tpu_custom_call.1} parent=5 // pred_region
        %s413 = ssub.s32 %s34, 1
        // Predicated region
        $region13: #{tpu_custom_call.1} parent=11 // pred_check
          %p414 = pneg %p203
        $region14: #{tpu_custom_call.1} parent=11 // pred_check_branch
          %416 = sbr.rel (%p414) target = $region16
        $region15: #{tpu_custom_call.1} parent=11 // pred_region
          %s418 = ssub.s32 1024, 1024
          %419 = vsyncadd [#allocation12], %s418
          %s420 = sshll.u32 [#allocation11], 4
          %s421 = int_to_ptr.vmem [resolvable:$true] %s420
          %426 = dma.hbm_to_vmem [thread:$0]  %s5, 1024, %s421, [#allocation12], 64, 64, 4
        $region16: #{tpu_custom_call.1} parent=11 // pred_fallthru
          _
        // Predicated region
        $region17: #{tpu_custom_call.1} parent=11 // pred_check
          %p427 = pneg %p224
        $region18: #{tpu_custom_call.1} parent=11 // pred_check_branch
          %429 = sbr.rel (%p427) target = $region20
        $region19: #{tpu_custom_call.1} parent=11 // pred_region
          _
        $region20: #{tpu_custom_call.1} parent=11 // pred_fallthru
          _
        // Predicated region
        $region21: #{tpu_custom_call.1} parent=11 // pred_check
          %p430 = pneg %p245
        $region22: #{tpu_custom_call.1} parent=11 // pred_check_branch
          %432 = sbr.rel (%p430) target = $region24
        $region23: #{tpu_custom_call.1} parent=11 // pred_region
          _
        $region24: #{tpu_custom_call.1} parent=11 // pred_fallthru
          _
        // Predicated region
        $region25: #{tpu_custom_call.1} parent=11 // pred_check
          %p433 = pneg %p266
        $region26: #{tpu_custom_call.1} parent=11 // pred_check_branch
          %435 = sbr.rel (%p433) target = $region28
        $region27: #{tpu_custom_call.1} parent=11 // pred_region
          %s437 = ssub.s32 4096, 4096
          %438 = vsyncadd [#allocation12], %s437
          %s439 = sshll.u32 [#allocation13], 4
          %s440 = int_to_ptr.vmem [resolvable:$true] %s439
          %445 = dma.hbm_to_vmem [thread:$0]  %s8, 4096, %s440, [#allocation12], 256, 256, 16
        $region28: #{tpu_custom_call.1} parent=11 // pred_fallthru
          _
        // Predicated region
        $region29: #{tpu_custom_call.1} parent=11 // pred_check
          %p446 = pneg %p287
        $region30: #{tpu_custom_call.1} parent=11 // pred_check_branch
          %448 = sbr.rel (%p446) target = $region32
        $region31: #{tpu_custom_call.1} parent=11 // pred_region
          _
        $region32: #{tpu_custom_call.1} parent=11 // pred_fallthru
          _
        // Predicated region
        $region33: #{tpu_custom_call.1} parent=11 // pred_check
          %p449 = pneg %p308
        $region34: #{tpu_custom_call.1} parent=11 // pred_check_branch
          %451 = sbr.rel (%p449) target = $region36
        $region35: #{tpu_custom_call.1} parent=11 // pred_region
          %s453 = ssub.s32 4096, 4096
          %454 = vsyncadd [#allocation15], %s453
          %s455 = sshll.u32 [#allocation14], 4
          %s456 = int_to_ptr.vmem [resolvable:$true] %s455
          %461 = dma.hbm_to_vmem [thread:$0]  %s10, 4096, %s456, [#allocation15], 64, 64, 4
        $region36: #{tpu_custom_call.1} parent=11 // pred_fallthru
          _
        // Predicated region
        $region37: #{tpu_custom_call.1} parent=11 // pred_check
          %p462 = pneg %p329
        $region38: #{tpu_custom_call.1} parent=11 // pred_check_branch
          %464 = sbr.rel (%p462) target = $region40
        $region39: #{tpu_custom_call.1} parent=11 // pred_region
          _
        $region40: #{tpu_custom_call.1} parent=11 // pred_fallthru
          _
        // Predicated region
        $region41: #{tpu_custom_call.1} parent=11 // pred_check
          %p465 = pneg %p350
        $region42: #{tpu_custom_call.1} parent=11 // pred_check_branch
          %467 = sbr.rel (%p465) target = $region44
        $region43: #{tpu_custom_call.1} parent=11 // pred_region
          _
        $region44: #{tpu_custom_call.1} parent=11 // pred_fallthru
          _
        // Predicated region
        $region45: #{tpu_custom_call.1} parent=11 // pred_check
          %p468 = pneg %p371
        $region46: #{tpu_custom_call.1} parent=11 // pred_check_branch
          %470 = sbr.rel (%p468) target = $region48
        $region47: #{tpu_custom_call.1} parent=11 // pred_region
          _
        $region48: #{tpu_custom_call.1} parent=11 // pred_fallthru
          _
      $region12: #{tpu_custom_call.1} parent=5 // pred_fallthru
        _
      %p471 = scmp.lt.s32.totalorder %s34, 2
      // Predicated region
      $region49: #{tpu_custom_call.1} parent=5 // pred_check
        %p472 = pneg %p471
      $region50: #{tpu_custom_call.1} parent=5 // pred_check_branch
        %474 = sbr.rel (%p472) target = $region52
      $region51: #{tpu_custom_call.1} parent=5 // pred_region
        // Predicated region
        $region53: #{tpu_custom_call.1} parent=51 // pred_check
          %p475 = pneg %p68
        $region54: #{tpu_custom_call.1} parent=51 // pred_check_branch
          %477 = sbr.rel (%p475) target = $region56
        $region55: #{tpu_custom_call.1} parent=51 // pred_region
          %s478 = sand.u32 %s58, 1
          %s479 = scalar_lea.sflag [#allocation3], %s478
          %s480 = sand.u32 %s58, 1
          %s481 = smul.addr %s480, 32
          %s482 = scalar_lea.vmem [#allocation2], %s481
          %s483 = smul.u32 2, %s42
          %s485 = ssub.s32 512, 512
          %486 = vsyncadd %s479, %s485
          %s487 = smul.addr %s41, 8
          %s488 = sadd.s32 %s483, %s487
          %s489 = smul.addr %s488, 64
          %s490 = scalar_lea.hbm %s0, %s489
          %s491 = sshll.u32 %s482, 4
          %s492 = int_to_ptr.vmem [resolvable:$true] %s491
          %497 = dma.hbm_to_vmem [thread:$0]  %s490, 512, %s492, %s479, 64, 64, 4
        $region56: #{tpu_custom_call.1} parent=51 // pred_fallthru
          _
        // Predicated region
        $region57: #{tpu_custom_call.1} parent=51 // pred_check
          %p498 = pneg %p94
        $region58: #{tpu_custom_call.1} parent=51 // pred_check_branch
          %500 = sbr.rel (%p498) target = $region60
        $region59: #{tpu_custom_call.1} parent=51 // pred_region
          %s501 = sand.u32 %s34, 1
          %s502 = scalar_lea.sflag [#allocation6], %s501
          %s503 = sand.u32 %s84, 1
          %s504 = smul.addr %s503, 32
          %s505 = scalar_lea.vmem [#allocation5], %s504
          %s507 = ssub.s32 512, 512
          %508 = vsyncadd %s502, %s507
          %s509 = smul.addr %s41, 8
          %s510 = smul.addr %s509, 64
          %s511 = scalar_lea.hbm %s1, %s510
          %s512 = sshll.u32 %s505, 4
          %s513 = int_to_ptr.vmem [resolvable:$true] %s512
          %518 = dma.hbm_to_vmem [thread:$0]  %s511, 512, %s513, %s502, 64, 64, 4
        $region60: #{tpu_custom_call.1} parent=51 // pred_fallthru
          _
        // Predicated region
        $region61: #{tpu_custom_call.1} parent=51 // pred_check
          %p519 = pneg %p120
        $region62: #{tpu_custom_call.1} parent=51 // pred_check_branch
          %521 = sbr.rel (%p519) target = $region64
        $region63: #{tpu_custom_call.1} parent=51 // pred_region
          %s522 = sand.u32 %s34, 1
          %s523 = scalar_lea.sflag [#allocation6], %s522
          %s524 = sand.u32 %s110, 1
          %s525 = smul.addr %s524, 32
          %s526 = scalar_lea.vmem [#allocation7], %s525
          %s528 = ssub.s32 512, 512
          %529 = vsyncadd %s523, %s528
          %s530 = smul.addr %s41, 8
          %s531 = smul.addr %s530, 64
          %s532 = scalar_lea.hbm %s2, %s531
          %s533 = sshll.u32 %s526, 4
          %s534 = int_to_ptr.vmem [resolvable:$true] %s533
          %539 = dma.hbm_to_vmem [thread:$0]  %s532, 512, %s534, %s523, 64, 64, 4
        $region64: #{tpu_custom_call.1} parent=51 // pred_fallthru
          _
        // Predicated region
        $region65: #{tpu_custom_call.1} parent=51 // pred_check
          %p540 = pneg %p148
        $region66: #{tpu_custom_call.1} parent=51 // pred_check_branch
          %542 = sbr.rel (%p540) target = $region68
        $region67: #{tpu_custom_call.1} parent=51 // pred_region
          %s543 = sand.u32 %s34, 1
          %s544 = scalar_lea.sflag [#allocation9], %s543
          %s545 = sand.u32 %s138, 1
          %s546 = smul.addr %s545, 16
          %s547 = scalar_lea.vmem [#allocation8], %s546
          %s548 = smul.u32 2, %s42
          %s550 = ssub.s32 256, 256
          %551 = vsyncadd %s544, %s550
          %s552 = smul.addr %s41, 2
          %s553 = sadd.s32 %s548, %s552
          %s554 = smul.addr %s553, 128
          %s555 = scalar_lea.hbm %s3, %s554
          %s556 = sshll.u32 %s547, 4
          %s557 = int_to_ptr.vmem [resolvable:$true] %s556
          %562 = dma.hbm_to_vmem [thread:$0]  %s555, 256, %s557, %s544, 128, 128, 8
        $region68: #{tpu_custom_call.1} parent=51 // pred_fallthru
          _
        // Predicated region
        $region69: #{tpu_custom_call.1} parent=51 // pred_check
          %p563 = pneg %p176
        $region70: #{tpu_custom_call.1} parent=51 // pred_check_branch
          %565 = sbr.rel (%p563) target = $region72
        $region71: #{tpu_custom_call.1} parent=51 // pred_region
          %s566 = sand.u32 %s34, 1
          %s567 = scalar_lea.sflag [#allocation9], %s566
          %s568 = sand.u32 %s166, 1
          %s569 = smul.addr %s568, 16
          %s570 = scalar_lea.vmem [#allocation10], %s569
          %s571 = smul.u32 2, %s42
          %s573 = ssub.s32 256, 256
          %574 = vsyncadd %s567, %s573
          %s575 = smul.addr %s41, 2
          %s576 = sadd.s32 %s571, %s575
          %s577 = smul.addr %s576, 128
          %s578 = scalar_lea.hbm %s4, %s577
          %s579 = sshll.u32 %s570, 4
          %s580 = int_to_ptr.vmem [resolvable:$true] %s579
          %585 = dma.hbm_to_vmem [thread:$0]  %s578, 256, %s580, %s567, 128, 128, 8
        $region72: #{tpu_custom_call.1} parent=51 // pred_fallthru
          _
      $region52: #{tpu_custom_call.1} parent=5 // pred_fallthru
        _
      %p586 = scmp.le.s32.totalorder 1, %s34
      %p587 = scmp.lt.s32.totalorder %s34, 3
      %p588 = pnand %p586, %p587
      %p589 = pneg %p588
      // Predicated region
      $region73: #{tpu_custom_call.1} parent=5 // pred_check
        _
      $region74: #{tpu_custom_call.1} parent=5 // pred_check_branch
        %591 = sbr.rel (%p588) target = $region76
      $region75: #{tpu_custom_call.1} parent=5 // pred_region
        %s592 = ssub.s32 %s34, 1
        %s593 = sand.u32 %s61, 1
        %s594 = scalar_lea.sflag [#allocation3], %s593
        %s595 = sand.u32 %s61, 1
        %s596 = smul.addr %s595, 32
        %s597 = scalar_lea.vmem [#allocation2], %s596
        // Predicated region
        $region77: #{tpu_custom_call.1} parent=75 // pred_check
          %p598 = pneg %p74
        $region78: #{tpu_custom_call.1} parent=75 // pred_check_branch
          %600 = sbr.rel (%p598) target = $region80
        $region79: #{tpu_custom_call.1} parent=75 // pred_region
          %601 = dma.done %s594, 512
        $region80: #{tpu_custom_call.1} parent=75 // pred_fallthru
          _
        %s602 = sand.u32 %s39, 1
        %s603 = scalar_lea.sflag [#allocation6], %s602
        %s604 = sand.u32 %s87, 1
        %s605 = smul.addr %s604, 32
        %s606 = scalar_lea.vmem [#allocation5], %s605
        // Predicated region
        $region81: #{tpu_custom_call.1} parent=75 // pred_check
          %p607 = pneg %p100
        $region82: #{tpu_custom_call.1} parent=75 // pred_check_branch
          %609 = sbr.rel (%p607) target = $region84
        $region83: #{tpu_custom_call.1} parent=75 // pred_region
          %610 = dma.done %s603, 512
        $region84: #{tpu_custom_call.1} parent=75 // pred_fallthru
          _
        %s611 = sand.u32 %s39, 1
        %s612 = scalar_lea.sflag [#allocation6], %s611
        %s613 = sand.u32 %s113, 1
        %s614 = smul.addr %s613, 32
        %s615 = scalar_lea.vmem [#allocation7], %s614
        // Predicated region
        $region85: #{tpu_custom_call.1} parent=75 // pred_check
          %p616 = pneg %p126
        $region86: #{tpu_custom_call.1} parent=75 // pred_check_branch
          %618 = sbr.rel (%p616) target = $region88
        $region87: #{tpu_custom_call.1} parent=75 // pred_region
          %619 = dma.done %s612, 512
        $region88: #{tpu_custom_call.1} parent=75 // pred_fallthru
          _
        %s620 = sand.u32 %s39, 1
        %s621 = scalar_lea.sflag [#allocation9], %s620
        %s622 = sand.u32 %s141, 1
        %s623 = smul.addr %s622, 16
        %s624 = scalar_lea.vmem [#allocation8], %s623
        // Predicated region
        $region89: #{tpu_custom_call.1} parent=75 // pred_check
          %p625 = pneg %p154
        $region90: #{tpu_custom_call.1} parent=75 // pred_check_branch
          %627 = sbr.rel (%p625) target = $region92
        $region91: #{tpu_custom_call.1} parent=75 // pred_region
          %628 = dma.done %s621, 256
        $region92: #{tpu_custom_call.1} parent=75 // pred_fallthru
          _
        %s629 = sand.u32 %s39, 1
        %s630 = scalar_lea.sflag [#allocation9], %s629
        %s631 = sand.u32 %s169, 1
        %s632 = smul.addr %s631, 16
        %s633 = scalar_lea.vmem [#allocation10], %s632
        // Predicated region
        $region93: #{tpu_custom_call.1} parent=75 // pred_check
          %p634 = pneg %p182
        $region94: #{tpu_custom_call.1} parent=75 // pred_check_branch
          %636 = sbr.rel (%p634) target = $region96
        $region95: #{tpu_custom_call.1} parent=75 // pred_region
          %637 = dma.done %s630, 256
        $region96: #{tpu_custom_call.1} parent=75 // pred_fallthru
          _
        // Predicated region
        $region97: #{tpu_custom_call.1} parent=75 // pred_check
          %p638 = pneg %p203
        $region98: #{tpu_custom_call.1} parent=75 // pred_check_branch
          %640 = sbr.rel (%p638) target = $region100
        $region99: #{tpu_custom_call.1} parent=75 // pred_region
          %641 = dma.done [#allocation12], 1024
        $region100: #{tpu_custom_call.1} parent=75 // pred_fallthru
          _
        // Predicated region
        $region101: #{tpu_custom_call.1} parent=75 // pred_check
          %p642 = pneg %p266
        $region102: #{tpu_custom_call.1} parent=75 // pred_check_branch
          %644 = sbr.rel (%p642) target = $region104
        $region103: #{tpu_custom_call.1} parent=75 // pred_region
          %645 = dma.done [#allocation12], 4096
        $region104: #{tpu_custom_call.1} parent=75 // pred_fallthru
          _
        // Predicated region
        $region105: #{tpu_custom_call.1} parent=75 // pred_check
          %p646 = pneg %p308
        $region106: #{tpu_custom_call.1} parent=75 // pred_check_branch
          %648 = sbr.rel (%p646) target = $region108
        $region107: #{tpu_custom_call.1} parent=75 // pred_region
          %649 = dma.done [#allocation15], 4096
        $region108: #{tpu_custom_call.1} parent=75 // pred_fallthru
          _
        %s650 = sand.u32 %s61, 1
        %s651 = scalar_lea.sflag [#allocation3], %s650
        %s652 = sand.u32 %s61, 1
        %s653 = smul.addr %s652, 32
        %s654 = scalar_lea.vmem [#allocation2], %s653
        %p655 = pneg %p74
        %p656 = pneg %p71
        %s657 = sand.u32 %s39, 1
        %s658 = scalar_lea.sflag [#allocation6], %s657
        %s659 = sand.u32 %s87, 1
        %s660 = smul.addr %s659, 32
        %s661 = scalar_lea.vmem [#allocation5], %s660
        %p662 = pneg %p100
        %p663 = pneg %p97
        %s664 = sand.u32 %s39, 1
        %s665 = scalar_lea.sflag [#allocation6], %s664
        %s666 = sand.u32 %s113, 1
        %s667 = smul.addr %s666, 32
        %s668 = scalar_lea.vmem [#allocation7], %s667
        %p669 = pneg %p126
        %p670 = pneg %p123
        %s671 = sand.u32 %s39, 1
        %s672 = scalar_lea.sflag [#allocation9], %s671
        %s673 = sand.u32 %s141, 1
        %s674 = smul.addr %s673, 16
        %s675 = scalar_lea.vmem [#allocation8], %s674
        %p676 = pneg %p154
        %p677 = pneg %p151
        %s678 = sand.u32 %s39, 1
        %s679 = scalar_lea.sflag [#allocation9], %s678
        %s680 = sand.u32 %s169, 1
        %s681 = smul.addr %s680, 16
        %s682 = scalar_lea.vmem [#allocation10], %s681
        %p683 = pneg %p182
        %p684 = pneg %p179
        %p685 = pneg %p203
        %p686 = pneg %p200
        %p687 = pneg %p224
        %p688 = pneg %p221
        %p689 = pneg %p245
        %p690 = pneg %p242
        %p691 = pneg %p266
        %p692 = pneg %p263
        %p693 = pneg %p287
        %p694 = pneg %p284
        %p695 = pneg %p308
        %p696 = pneg %p305
        %p697 = pneg %p329
        %p698 = pneg %p326
        %p699 = pneg %p350
        %p700 = pneg %p347
        %p701 = pneg %p371
        %p702 = pneg %p368
        %p703 = pneg %p399
        %p704 = pneg %p396
        %s705 = sand.u32 %s386, 1
        %s706 = scalar_lea.sflag [#allocation4], %s705
        %s707 = sand.u32 %s386, 1
        %s708 = smul.addr %s707, 16
        %s709 = scalar_lea.vmem [#allocation16], %s708
        %s710 = smul.u32 2, %s44
        %s711 = smul.u32 2, %s44
        %s712 = smul.u32 2, %s44
        %s713 = smul.u32 2, %s44
        %v716 = vld [vmem:[%s597] sm:$0xf]
        %v717 = vld [vmem:[%s597 + $0x4] sm:$0xf]
        %v718 = vld [vmem:[%s597 + $0x8] sm:$0xf]
        %v719 = vld [vmem:[%s597 + $0xc] sm:$0xf]
        %v720 = vld [vmem:[%s597 + $0x10] sm:$0xf]
        %v721 = vld [vmem:[%s597 + $0x14] sm:$0xf]
        %v722 = vld [vmem:[%s597 + $0x18] sm:$0xf]
        %v723 = vld [vmem:[%s597 + $0x1c] sm:$0xf]
        %v724 = vmul.bf16 %v716, 1035287989
        %v725 = vmul.bf16 %v717, 1035287989
        %v726 = vmul.bf16 %v718, 1035287989
        %v727 = vmul.bf16 %v719, 1035287989
        %v728 = vmul.bf16 %v720, 1035287989
        %v729 = vmul.bf16 %v721, 1035287989
        %v730 = vmul.bf16 %v722, 1035287989
        %v731 = vmul.bf16 %v723, 1035287989
        %v732 = vld [vmem:[%s606] sm:$0xf]
        %v733 = vld [vmem:[%s606 + $0x4] sm:$0xf]
        %v734 = vld [vmem:[%s606 + $0x8] sm:$0xf]
        %v735 = vld [vmem:[%s606 + $0xc] sm:$0xf]
        %v736 = vld [vmem:[%s606 + $0x10] sm:$0xf]
        %v737 = vld [vmem:[%s606 + $0x14] sm:$0xf]
        %v738 = vld [vmem:[%s606 + $0x18] sm:$0xf]
        %v739 = vld [vmem:[%s606 + $0x1c] sm:$0xf]
        %v740 = vld [vmem:[%s615] sm:$0xf]
        %v741 = vld [vmem:[%s615 + $0x4] sm:$0xf]
        %v742 = vld [vmem:[%s615 + $0x8] sm:$0xf]
        %v743 = vld [vmem:[%s615 + $0xc] sm:$0xf]
        %v744 = vld [vmem:[%s615 + $0x10] sm:$0xf]
        %v745 = vld [vmem:[%s615 + $0x14] sm:$0xf]
        %v746 = vld [vmem:[%s615 + $0x18] sm:$0xf]
        %v747 = vld [vmem:[%s615 + $0x1c] sm:$0xf]
        %v750 = vunpack.c.l.b16 %v724
        %v751 = vunpack.c.l.b16 %v725
        %v752 = vpack.c.b16 %v751, %v750
        %v755 = vunpack.c.l.b16 %v732
        %v756 = vunpack.c.l.b16 %v733
        %v757 = vpack.c.b16 %v756, %v755
        %vm758 = vcmask 261120
        %v760 = vsel %vm758, %v752, 0
        %v763 = vsel %vm758, %v757, 0
        %765 = vmatprep.subr.bf16.mxu0 0
        %766 = vmatpush1.bf16.xpose.msra.mxu0 %v763
        %767 = vmatprep.subr.bf16.mxu0 0
        %768 = vmatpush1.bf16.xpose.msra.mxu0 0
        %769 = vmatprep.subr.bf16.mxu0 0
        %770 = vmatpush1.bf16.xpose.msra.mxu0 0
        %771 = vmatprep.subr.bf16.mxu0 0
        %772 = vmatpush1.bf16.xpose.msra.mxu0 0
        %773 = vmatprep.subr.bf16.mxu0 0
        %774 = vmatpush1.bf16.xpose.msra.mxu0 0
        %775 = vmatprep.subr.bf16.mxu0 0
        %776 = vmatpush1.bf16.xpose.msra.mxu0 0
        %777 = vmatprep.subr.bf16.mxu0 0
        %778 = vmatpush1.bf16.xpose.msra.mxu0 0
        %779 = vmatprep.subr.bf16.mxu0 0
        %780 = vmatpush1.bf16.xpose.msra.mxu0 0
        %781 = vmatprep.subr.bf16.mxu0 0
        %782 = vmatpush1.bf16.xpose.msra.mxu0 0
        %783 = vmatprep.subr.bf16.mxu0 0
        %784 = vmatpush1.bf16.xpose.msra.mxu0 0
        %785 = vmatprep.subr.bf16.mxu0 0
        %786 = vmatpush1.bf16.xpose.msra.mxu0 0
        %787 = vmatprep.subr.bf16.mxu0 0
        %788 = vmatpush1.bf16.xpose.msra.mxu0 0
        %789 = vmatprep.subr.bf16.mxu0 0
        %790 = vmatpush1.bf16.xpose.msra.mxu0 0
        %791 = vmatprep.subr.bf16.mxu0 0
        %792 = vmatpush1.bf16.xpose.msra.mxu0 0
        %793 = vmatprep.subr.bf16.mxu0 0
        %794 = vmatpush1.bf16.xpose.msra.mxu0 0
        %795 = vmatprep.subr.bf16.mxu0 0
        %796 = vmatpush1.bf16.xpose.msra.mxu0 0
        %797 = vmatprep.mubr.bf16.mxu0 0
        %798 = vmatmul.mubr.bf16.gmra.mrb[0].mxu0 %v760
        %v799 = vpop.f32.mrb[0].mxu0
        %v800 = vadd.f32 0.0, %v799
        %v801 = vpop.f32.mrb[0].mxu0
        %v802 = vpop.f32.mrb[0].mxu0
        %v803 = vadd.f32 0.0, %v802
        %v804 = vpop.f32.mrb[0].mxu0
        %805 = vdwg.mxu0
        %v808 = vunpack.c.l.b16 %v726
        %v809 = vunpack.c.l.b16 %v727
        %v810 = vpack.c.b16 %v809, %v808
        %v813 = vunpack.c.l.b16 %v734
        %v814 = vunpack.c.l.b16 %v735
        %v815 = vpack.c.b16 %v814, %v813
        %v817 = vsel %vm758, %v810, 0
        %v820 = vsel %vm758, %v815, 0
        %822 = vmatprep.subr.bf16.mxu0 0
        %823 = vmatpush1.bf16.xpose.msra.mxu0 %v820
        %824 = vmatprep.subr.bf16.mxu0 0
        %825 = vmatpush1.bf16.xpose.msra.mxu0 0
        %826 = vmatprep.subr.bf16.mxu0 0
        %827 = vmatpush1.bf16.xpose.msra.mxu0 0
        %828 = vmatprep.subr.bf16.mxu0 0
        %829 = vmatpush1.bf16.xpose.msra.mxu0 0
        %830 = vmatprep.subr.bf16.mxu0 0
        %831 = vmatpush1.bf16.xpose.msra.mxu0 0
        %832 = vmatprep.subr.bf16.mxu0 0
        %833 = vmatpush1.bf16.xpose.msra.mxu0 0
        %834 = vmatprep.subr.bf16.mxu0 0
        %835 = vmatpush1.bf16.xpose.msra.mxu0 0
        %836 = vmatprep.subr.bf16.mxu0 0
        %837 = vmatpush1.bf16.xpose.msra.mxu0 0
        %838 = vmatprep.subr.bf16.mxu0 0
        %839 = vmatpush1.bf16.xpose.msra.mxu0 0
        %840 = vmatprep.subr.bf16.mxu0 0
        %841 = vmatpush1.bf16.xpose.msra.mxu0 0
        %842 = vmatprep.subr.bf16.mxu0 0
        %843 = vmatpush1.bf16.xpose.msra.mxu0 0
        %844 = vmatprep.subr.bf16.mxu0 0
        %845 = vmatpush1.bf16.xpose.msra.mxu0 0
        %846 = vmatprep.subr.bf16.mxu0 0
        %847 = vmatpush1.bf16.xpose.msra.mxu0 0
        %848 = vmatprep.subr.bf16.mxu0 0
        %849 = vmatpush1.bf16.xpose.msra.mxu0 0
        %850 = vmatprep.subr.bf16.mxu0 0
        %851 = vmatpush1.bf16.xpose.msra.mxu0 0
        %852 = vmatprep.subr.bf16.mxu0 0
        %853 = vmatpush1.bf16.xpose.msra.mxu0 0
        %854 = vmatprep.mubr.bf16.mxu0 0
        %855 = vmatmul.mubr.bf16.gmra.mrb[0].mxu0 %v817
        %v856 = vpop.f32.mrb[0].mxu0
        %v857 = vadd.f32 0.0, %v856
        %v858 = vpop.f32.mrb[0].mxu0
        %v859 = vpop.f32.mrb[0].mxu0
        %v860 = vadd.f32 0.0, %v859
        %v861 = vpop.f32.mrb[0].mxu0
        %862 = vdwg.mxu0
        %v865 = vunpack.c.l.b16 %v728
        %v866 = vunpack.c.l.b16 %v729
        %v867 = vpack.c.b16 %v866, %v865
        %v870 = vunpack.c.l.b16 %v736
        %v871 = vunpack.c.l.b16 %v737
        %v872 = vpack.c.b16 %v871, %v870
        %v874 = vsel %vm758, %v867, 0
        %v877 = vsel %vm758, %v872, 0
        %879 = vmatprep.subr.bf16.mxu0 0
        %880 = vmatpush1.bf16.xpose.msra.mxu0 %v877
        %881 = vmatprep.subr.bf16.mxu0 0
        %882 = vmatpush1.bf16.xpose.msra.mxu0 0
        %883 = vmatprep.subr.bf16.mxu0 0
        %884 = vmatpush1.bf16.xpose.msra.mxu0 0
        %885 = vmatprep.subr.bf16.mxu0 0
        %886 = vmatpush1.bf16.xpose.msra.mxu0 0
        %887 = vmatprep.subr.bf16.mxu0 0
        %888 = vmatpush1.bf16.xpose.msra.mxu0 0
        %889 = vmatprep.subr.bf16.mxu0 0
        %890 = vmatpush1.bf16.xpose.msra.mxu0 0
        %891 = vmatprep.subr.bf16.mxu0 0
        %892 = vmatpush1.bf16.xpose.msra.mxu0 0
        %893 = vmatprep.subr.bf16.mxu0 0
        %894 = vmatpush1.bf16.xpose.msra.mxu0 0
        %895 = vmatprep.subr.bf16.mxu0 0
        %896 = vmatpush1.bf16.xpose.msra.mxu0 0
        %897 = vmatprep.subr.bf16.mxu0 0
        %898 = vmatpush1.bf16.xpose.msra.mxu0 0
        %899 = vmatprep.subr.bf16.mxu0 0
        %900 = vmatpush1.bf16.xpose.msra.mxu0 0
        %901 = vmatprep.subr.bf16.mxu0 0
        %902 = vmatpush1.bf16.xpose.msra.mxu0 0
        %903 = vmatprep.subr.bf16.mxu0 0
        %904 = vmatpush1.bf16.xpose.msra.mxu0 0
        %905 = vmatprep.subr.bf16.mxu0 0
        %906 = vmatpush1.bf16.xpose.msra.mxu0 0
        %907 = vmatprep.subr.bf16.mxu0 0
        %908 = vmatpush1.bf16.xpose.msra.mxu0 0
        %909 = vmatprep.subr.bf16.mxu0 0
        %910 = vmatpush1.bf16.xpose.msra.mxu0 0
        %911 = vmatprep.mubr.bf16.mxu0 0
        %912 = vmatmul.mubr.bf16.gmra.mrb[0].mxu0 %v874
        %v913 = vpop.f32.mrb[0].mxu0
        %v914 = vadd.f32 0.0, %v913
        %v915 = vpop.f32.mrb[0].mxu0
        %v916 = vpop.f32.mrb[0].mxu0
        %v917 = vadd.f32 0.0, %v916
        %v918 = vpop.f32.mrb[0].mxu0
        %919 = vdwg.mxu0
        %v922 = vunpack.c.l.b16 %v730
        %v923 = vunpack.c.l.b16 %v731
        %v924 = vpack.c.b16 %v923, %v922
        %v927 = vunpack.c.l.b16 %v738
        %v928 = vunpack.c.l.b16 %v739
        %v929 = vpack.c.b16 %v928, %v927
        %v931 = vsel %vm758, %v924, 0
        %v934 = vsel %vm758, %v929, 0
        %936 = vmatprep.subr.bf16.mxu0 0
        %937 = vmatpush1.bf16.xpose.msra.mxu0 %v934
        %938 = vmatprep.subr.bf16.mxu0 0
        %939 = vmatpush1.bf16.xpose.msra.mxu0 0
        %940 = vmatprep.subr.bf16.mxu0 0
        %941 = vmatpush1.bf16.xpose.msra.mxu0 0
        %942 = vmatprep.subr.bf16.mxu0 0
        %943 = vmatpush1.bf16.xpose.msra.mxu0 0
        %944 = vmatprep.subr.bf16.mxu0 0
        %945 = vmatpush1.bf16.xpose.msra.mxu0 0
        %946 = vmatprep.subr.bf16.mxu0 0
        %947 = vmatpush1.bf16.xpose.msra.mxu0 0
        %948 = vmatprep.subr.bf16.mxu0 0
        %949 = vmatpush1.bf16.xpose.msra.mxu0 0
        %950 = vmatprep.subr.bf16.mxu0 0
        %951 = vmatpush1.bf16.xpose.msra.mxu0 0
        %952 = vmatprep.subr.bf16.mxu0 0
        %953 = vmatpush1.bf16.xpose.msra.mxu0 0
        %954 = vmatprep.subr.bf16.mxu0 0
        %955 = vmatpush1.bf16.xpose.msra.mxu0 0
        %956 = vmatprep.subr.bf16.mxu0 0
        %957 = vmatpush1.bf16.xpose.msra.mxu0 0
        %958 = vmatprep.subr.bf16.mxu0 0
        %959 = vmatpush1.bf16.xpose.msra.mxu0 0
        %960 = vmatprep.subr.bf16.mxu0 0
        %961 = vmatpush1.bf16.xpose.msra.mxu0 0
        %962 = vmatprep.subr.bf16.mxu0 0
        %963 = vmatpush1.bf16.xpose.msra.mxu0 0
        %964 = vmatprep.subr.bf16.mxu0 0
        %965 = vmatpush1.bf16.xpose.msra.mxu0 0
        %966 = vmatprep.subr.bf16.mxu0 0
        %967 = vmatpush1.bf16.xpose.msra.mxu0 0
        %968 = vmatprep.mubr.bf16.mxu0 0
        %969 = vmatmul.mubr.bf16.gmra.mrb[0].mxu0 %v931
        %v970 = vpop.f32.mrb[0].mxu0
        %v971 = vadd.f32 0.0, %v970
        %v972 = vpop.f32.mrb[0].mxu0
        %v973 = vpop.f32.mrb[0].mxu0
        %v974 = vadd.f32 0.0, %v973
        %v975 = vpop.f32.mrb[0].mxu0
        %976 = vdwg.mxu0
        %v977 = vld [vmem:[%s633] sm:$0xff]
        %v978 = vld [vmem:[%s633 + $0x8] sm:$0xff]
        %vm979 = vcmp.eq.s32.totalorder %v977, 0
        %vm980 = vcmp.eq.s32.totalorder %v978, 0
        %v981 = vsel %vm979, 1, 0
        %v982 = vsel %vm980, 1, 0
        %vm983 = vcmp.eq.s32.totalorder %v981, 1
        %vm984 = vcmp.eq.s32.totalorder %v982, 1
        %v985 = vsel %vm983, -8.838835e+18, %v800
        %v986 = vsel %vm984, -8.838835e+18, %v803
        %v987 = vsel %vm983, -8.838835e+18, %v857
        %v988 = vsel %vm984, -8.838835e+18, %v860
        %v989 = vsel %vm983, -8.838835e+18, %v914
        %v990 = vsel %vm984, -8.838835e+18, %v917
        %v991 = vsel %vm983, -8.838835e+18, %v971
        %v992 = vsel %vm984, -8.838835e+18, %v974
        %vm993 = vcmask 130048
        %v994 = vsel %vm993, %v985, -inf
        %995 = vmax.xlane.f32.xlu0 %v994
        %v996 = vpop.xlane.xlu0 %995
        %v997 = vsel %vm993, %v986, -inf
        %998 = vmax.xlane.f32.xlu0 %v997
        %v999 = vpop.xlane.xlu0 %998
        %v1000 = vsel %vm993, %v987, -inf
        %1001 = vmax.xlane.f32.xlu0 %v1000
        %v1002 = vpop.xlane.xlu0 %1001
        %v1003 = vsel %vm993, %v988, -inf
        %1004 = vmax.xlane.f32.xlu0 %v1003
        %v1005 = vpop.xlane.xlu0 %1004
        %v1006 = vsel %vm993, %v989, -inf
        %1007 = vmax.xlane.f32.xlu0 %v1006
        %v1008 = vpop.xlane.xlu0 %1007
        %v1009 = vsel %vm993, %v990, -inf
        %1010 = vmax.xlane.f32.xlu0 %v1009
        %v1011 = vpop.xlane.xlu0 %1010
        %v1012 = vsel %vm993, %v991, -inf
        %1013 = vmax.xlane.f32.xlu0 %v1012
        %v1014 = vpop.xlane.xlu0 %1013
        %v1015 = vsel %vm993, %v992, -inf
        %1016 = vmax.xlane.f32.xlu0 %v1015
        %v1017 = vpop.xlane.xlu0 %1016
        %v1018 = vsub.f32 %v985, %v996
        %v1019 = vsub.f32 %v986, %v999
        %v1020 = vsub.f32 %v987, %v1002
        %v1021 = vsub.f32 %v988, %v1005
        %v1022 = vsub.f32 %v989, %v1008
        %v1023 = vsub.f32 %v990, %v1011
        %v1024 = vsub.f32 %v991, %v1014
        %v1025 = vsub.f32 %v992, %v1017
        %v1026 = vmul.f32 %v1018, 1.442695
        %v1027 = vpow.pop %v1026
        %v1028 = vmul.f32 %v1019, 1.442695
        %v1029 = vpow.pop %v1028
        %v1030 = vmul.f32 %v1020, 1.442695
        %v1031 = vpow.pop %v1030
        %v1032 = vmul.f32 %v1021, 1.442695
        %v1033 = vpow.pop %v1032
        %v1034 = vmul.f32 %v1022, 1.442695
        %v1035 = vpow.pop %v1034
        %v1036 = vmul.f32 %v1023, 1.442695
        %v1037 = vpow.pop %v1036
        %v1038 = vmul.f32 %v1024, 1.442695
        %v1039 = vpow.pop %v1038
        %v1040 = vmul.f32 %v1025, 1.442695
        %v1041 = vpow.pop %v1040
        %v1042 = vsel %vm993, %v1027, 0.0
        %1043 = vadd.xlane.f32.xlu0 %v1042
        %v1044 = vpop.xlane.xlu0 %1043
        %v1045 = vsel %vm993, %v1029, 0.0
        %1046 = vadd.xlane.f32.xlu0 %v1045
        %v1047 = vpop.xlane.xlu0 %1046
        %v1048 = vsel %vm993, %v1031, 0.0
        %1049 = vadd.xlane.f32.xlu0 %v1048
        %v1050 = vpop.xlane.xlu0 %1049
        %v1051 = vsel %vm993, %v1033, 0.0
        %1052 = vadd.xlane.f32.xlu0 %v1051
        %v1053 = vpop.xlane.xlu0 %1052
        %v1054 = vsel %vm993, %v1035, 0.0
        %1055 = vadd.xlane.f32.xlu0 %v1054
        %v1056 = vpop.xlane.xlu0 %1055
        %v1057 = vsel %vm993, %v1037, 0.0
        %1058 = vadd.xlane.f32.xlu0 %v1057
        %v1059 = vpop.xlane.xlu0 %1058
        %v1060 = vsel %vm993, %v1039, 0.0
        %1061 = vadd.xlane.f32.xlu0 %v1060
        %v1062 = vpop.xlane.xlu0 %1061
        %v1063 = vsel %vm993, %v1041, 0.0
        %1064 = vadd.xlane.f32.xlu0 %v1063
        %v1065 = vpop.xlane.xlu0 %1064
        %v1066 = vrcp.pop %v1044
        %v1067 = vrcp.pop %v1047
        %v1068 = vrcp.pop %v1050
        %v1069 = vrcp.pop %v1053
        %v1070 = vrcp.pop %v1056
        %v1071 = vrcp.pop %v1059
        %v1072 = vrcp.pop %v1062
        %v1073 = vrcp.pop %v1065
        %v1074 = vmul.f32 %v1027, %v1066
        %v1075 = vmul.f32 %v1029, %v1067
        %v1076 = vmul.f32 %v1031, %v1068
        %v1077 = vmul.f32 %v1033, %v1069
        %v1078 = vmul.f32 %v1035, %v1070
        %v1079 = vmul.f32 %v1037, %v1071
        %v1080 = vmul.f32 %v1039, %v1072
        %v1081 = vmul.f32 %v1041, %v1073
        %v1082 = vpack.c.bf16 %v1075, %v1074
        %v1083 = vpack.c.bf16 %v1077, %v1076
        %v1084 = vpack.c.bf16 %v1079, %v1078
        %v1085 = vpack.c.bf16 %v1081, %v1080
        %v1088 = vunpack.c.l.b16 %v740
        %v1089 = vunpack.c.l.b16 %v741
        %v1090 = vpack.c.b16 %v1089, %v1088
        %v1093 = vsel %vm993, %v1082, 0
        %1095 = vmatprep.subr.bf16.mxu0 0
        %1096 = vmatpush1.bf16.msra.mxu0 %v1090
        %1097 = vmatprep.subr.bf16.mxu0 0
        %1098 = vmatpush1.bf16.msra.mxu0 0
        %1099 = vmatprep.subr.bf16.mxu0 0
        %1100 = vmatpush1.bf16.msra.mxu0 0
        %1101 = vmatprep.subr.bf16.mxu0 0
        %1102 = vmatpush1.bf16.msra.mxu0 0
        %1103 = vmatprep.subr.bf16.mxu0 0
        %1104 = vmatpush1.bf16.msra.mxu0 0
        %1105 = vmatprep.subr.bf16.mxu0 0
        %1106 = vmatpush1.bf16.msra.mxu0 0
        %1107 = vmatprep.subr.bf16.mxu0 0
        %1108 = vmatpush1.bf16.msra.mxu0 0
        %1109 = vmatprep.subr.bf16.mxu0 0
        %1110 = vmatpush1.bf16.msra.mxu0 0
        %1111 = vmatprep.subr.bf16.mxu0 0
        %1112 = vmatpush1.bf16.msra.mxu0 0
        %1113 = vmatprep.subr.bf16.mxu0 0
        %1114 = vmatpush1.bf16.msra.mxu0 0
        %1115 = vmatprep.subr.bf16.mxu0 0
        %1116 = vmatpush1.bf16.msra.mxu0 0
        %1117 = vmatprep.subr.bf16.mxu0 0
        %1118 = vmatpush1.bf16.msra.mxu0 0
        %1119 = vmatprep.subr.bf16.mxu0 0
        %1120 = vmatpush1.bf16.msra.mxu0 0
        %1121 = vmatprep.subr.bf16.mxu0 0
        %1122 = vmatpush1.bf16.msra.mxu0 0
        %1123 = vmatprep.subr.bf16.mxu0 0
        %1124 = vmatpush1.bf16.msra.mxu0 0
        %1125 = vmatprep.subr.bf16.mxu0 0
        %1126 = vmatpush1.bf16.msra.mxu0 0
        %1127 = vmatprep.mubr.bf16.mxu0 0
        %1128 = vmatmul.mubr.bf16.gmra.mrb[0].mxu0 %v1093
        %v1129 = vpop.f32.mrb[0].mxu0
        %v1130 = vadd.f32 0.0, %v1129
        %v1131 = vpop.f32.mrb[0].mxu0
        %v1132 = vpop.f32.mrb[0].mxu0
        %v1133 = vadd.f32 0.0, %v1132
        %v1134 = vpop.f32.mrb[0].mxu0
        %1135 = vdwg.mxu0
        %v1138 = vunpack.c.l.b16 %v742
        %v1139 = vunpack.c.l.b16 %v743
        %v1140 = vpack.c.b16 %v1139, %v1138
        %v1143 = vsel %vm993, %v1083, 0
        %1145 = vmatprep.subr.bf16.mxu0 0
        %1146 = vmatpush1.bf16.msra.mxu0 %v1140
        %1147 = vmatprep.subr.bf16.mxu0 0
        %1148 = vmatpush1.bf16.msra.mxu0 0
        %1149 = vmatprep.subr.bf16.mxu0 0
        %1150 = vmatpush1.bf16.msra.mxu0 0
        %1151 = vmatprep.subr.bf16.mxu0 0
        %1152 = vmatpush1.bf16.msra.mxu0 0
        %1153 = vmatprep.subr.bf16.mxu0 0
        %1154 = vmatpush1.bf16.msra.mxu0 0
        %1155 = vmatprep.subr.bf16.mxu0 0
        %1156 = vmatpush1.bf16.msra.mxu0 0
        %1157 = vmatprep.subr.bf16.mxu0 0
        %1158 = vmatpush1.bf16.msra.mxu0 0
        %1159 = vmatprep.subr.bf16.mxu0 0
        %1160 = vmatpush1.bf16.msra.mxu0 0
        %1161 = vmatprep.subr.bf16.mxu0 0
        %1162 = vmatpush1.bf16.msra.mxu0 0
        %1163 = vmatprep.subr.bf16.mxu0 0
        %1164 = vmatpush1.bf16.msra.mxu0 0
        %1165 = vmatprep.subr.bf16.mxu0 0
        %1166 = vmatpush1.bf16.msra.mxu0 0
        %1167 = vmatprep.subr.bf16.mxu0 0
        %1168 = vmatpush1.bf16.msra.mxu0 0
        %1169 = vmatprep.subr.bf16.mxu0 0
        %1170 = vmatpush1.bf16.msra.mxu0 0
        %1171 = vmatprep.subr.bf16.mxu0 0
        %1172 = vmatpush1.bf16.msra.mxu0 0
        %1173 = vmatprep.subr.bf16.mxu0 0
        %1174 = vmatpush1.bf16.msra.mxu0 0
        %1175 = vmatprep.subr.bf16.mxu0 0
        %1176 = vmatpush1.bf16.msra.mxu0 0
        %1177 = vmatprep.mubr.bf16.mxu0 0
        %1178 = vmatmul.mubr.bf16.gmra.mrb[0].mxu0 %v1143
        %v1179 = vpop.f32.mrb[0].mxu0
        %v1180 = vadd.f32 0.0, %v1179
        %v1181 = vpop.f32.mrb[0].mxu0
        %v1182 = vpop.f32.mrb[0].mxu0
        %v1183 = vadd.f32 0.0, %v1182
        %v1184 = vpop.f32.mrb[0].mxu0
        %1185 = vdwg.mxu0
        %v1188 = vunpack.c.l.b16 %v744
        %v1189 = vunpack.c.l.b16 %v745
        %v1190 = vpack.c.b16 %v1189, %v1188
        %v1193 = vsel %vm993, %v1084, 0
        %1195 = vmatprep.subr.bf16.mxu0 0
        %1196 = vmatpush1.bf16.msra.mxu0 %v1190
        %1197 = vmatprep.subr.bf16.mxu0 0
        %1198 = vmatpush1.bf16.msra.mxu0 0
        %1199 = vmatprep.subr.bf16.mxu0 0
        %1200 = vmatpush1.bf16.msra.mxu0 0
        %1201 = vmatprep.subr.bf16.mxu0 0
        %1202 = vmatpush1.bf16.msra.mxu0 0
        %1203 = vmatprep.subr.bf16.mxu0 0
        %1204 = vmatpush1.bf16.msra.mxu0 0
        %1205 = vmatprep.subr.bf16.mxu0 0
        %1206 = vmatpush1.bf16.msra.mxu0 0
        %1207 = vmatprep.subr.bf16.mxu0 0
        %1208 = vmatpush1.bf16.msra.mxu0 0
        %1209 = vmatprep.subr.bf16.mxu0 0
        %1210 = vmatpush1.bf16.msra.mxu0 0
        %1211 = vmatprep.subr.bf16.mxu0 0
        %1212 = vmatpush1.bf16.msra.mxu0 0
        %1213 = vmatprep.subr.bf16.mxu0 0
        %1214 = vmatpush1.bf16.msra.mxu0 0
        %1215 = vmatprep.subr.bf16.mxu0 0
        %1216 = vmatpush1.bf16.msra.mxu0 0
        %1217 = vmatprep.subr.bf16.mxu0 0
        %1218 = vmatpush1.bf16.msra.mxu0 0
        %1219 = vmatprep.subr.bf16.mxu0 0
        %1220 = vmatpush1.bf16.msra.mxu0 0
        %1221 = vmatprep.subr.bf16.mxu0 0
        %1222 = vmatpush1.bf16.msra.mxu0 0
        %1223 = vmatprep.subr.bf16.mxu0 0
        %1224 = vmatpush1.bf16.msra.mxu0 0
        %1225 = vmatprep.subr.bf16.mxu0 0
        %1226 = vmatpush1.bf16.msra.mxu0 0
        %1227 = vmatprep.mubr.bf16.mxu0 0
        %1228 = vmatmul.mubr.bf16.gmra.mrb[0].mxu0 %v1193
        %v1229 = vpop.f32.mrb[0].mxu0
        %v1230 = vadd.f32 0.0, %v1229
        %v1231 = vpop.f32.mrb[0].mxu0
        %v1232 = vpop.f32.mrb[0].mxu0
        %v1233 = vadd.f32 0.0, %v1232
        %v1234 = vpop.f32.mrb[0].mxu0
        %1235 = vdwg.mxu0
        %v1238 = vunpack.c.l.b16 %v746
        %v1239 = vunpack.c.l.b16 %v747
        %v1240 = vpack.c.b16 %v1239, %v1238
        %v1243 = vsel %vm993, %v1085, 0
        %1245 = vmatprep.subr.bf16.mxu0 0
        %1246 = vmatpush1.bf16.msra.mxu0 %v1240
        %1247 = vmatprep.subr.bf16.mxu0 0
        %1248 = vmatpush1.bf16.msra.mxu0 0
        %1249 = vmatprep.subr.bf16.mxu0 0
        %1250 = vmatpush1.bf16.msra.mxu0 0
        %1251 = vmatprep.subr.bf16.mxu0 0
        %1252 = vmatpush1.bf16.msra.mxu0 0
        %1253 = vmatprep.subr.bf16.mxu0 0
        %1254 = vmatpush1.bf16.msra.mxu0 0
        %1255 = vmatprep.subr.bf16.mxu0 0
        %1256 = vmatpush1.bf16.msra.mxu0 0
        %1257 = vmatprep.subr.bf16.mxu0 0
        %1258 = vmatpush1.bf16.msra.mxu0 0
        %1259 = vmatprep.subr.bf16.mxu0 0
        %1260 = vmatpush1.bf16.msra.mxu0 0
        %1261 = vmatprep.subr.bf16.mxu0 0
        %1262 = vmatpush1.bf16.msra.mxu0 0
        %1263 = vmatprep.subr.bf16.mxu0 0
        %1264 = vmatpush1.bf16.msra.mxu0 0
        %1265 = vmatprep.subr.bf16.mxu0 0
        %1266 = vmatpush1.bf16.msra.mxu0 0
        %1267 = vmatprep.subr.bf16.mxu0 0
        %1268 = vmatpush1.bf16.msra.mxu0 0
        %1269 = vmatprep.subr.bf16.mxu0 0
        %1270 = vmatpush1.bf16.msra.mxu0 0
        %1271 = vmatprep.subr.bf16.mxu0 0
        %1272 = vmatpush1.bf16.msra.mxu0 0
        %1273 = vmatprep.subr.bf16.mxu0 0
        %1274 = vmatpush1.bf16.msra.mxu0 0
        %1275 = vmatprep.subr.bf16.mxu0 0
        %1276 = vmatpush1.bf16.msra.mxu0 0
        %1277 = vmatprep.mubr.bf16.mxu0 0
        %1278 = vmatmul.mubr.bf16.gmra.mrb[0].mxu0 %v1243
        %v1279 = vpop.f32.mrb[0].mxu0
        %v1280 = vadd.f32 0.0, %v1279
        %v1281 = vpop.f32.mrb[0].mxu0
        %v1282 = vpop.f32.mrb[0].mxu0
        %v1283 = vadd.f32 0.0, %v1282
        %v1284 = vpop.f32.mrb[0].mxu0
        %1285 = vdwg.mxu0
        %v1286 = vpack.c.bf16 %v1133, %v1130
        %v1287 = vpack.c.bf16 %v1183, %v1180
        %v1288 = vpack.c.bf16 %v1233, %v1230
        %v1289 = vpack.c.bf16 %v1283, %v1280
        %v1290 = vld [vmem:[#allocation11] sm:$0xf]
        %v1291 = vld [vmem:[#allocation11 + $0x4] sm:$0xf]
        %v1292 = vld [vmem:[#allocation11 + $0x8] sm:$0xf]
        %v1293 = vld [vmem:[#allocation11 + $0xc] sm:$0xf]
        %v1294 = vld [vmem:[#allocation11 + $0x10] sm:$0xf]
        %v1295 = vld [vmem:[#allocation11 + $0x14] sm:$0xf]
        %v1296 = vld [vmem:[#allocation11 + $0x18] sm:$0xf]
        %v1297 = vld [vmem:[#allocation11 + $0x1c] sm:$0xf]
        %v1298 = vld [vmem:[#allocation11 + $0x20] sm:$0xf]
        %v1299 = vld [vmem:[#allocation11 + $0x24] sm:$0xf]
        %v1300 = vld [vmem:[#allocation11 + $0x28] sm:$0xf]
        %v1301 = vld [vmem:[#allocation11 + $0x2c] sm:$0xf]
        %v1302 = vld [vmem:[#allocation11 + $0x30] sm:$0xf]
        %v1303 = vld [vmem:[#allocation11 + $0x34] sm:$0xf]
        %v1304 = vld [vmem:[#allocation11 + $0x38] sm:$0xf]
        %v1305 = vld [vmem:[#allocation11 + $0x3c] sm:$0xf]
        %v1310 = vunpack.c.l.b16 %v1290
        %v1311 = vunpack.c.l.b16 %v1291
        %v1312 = vunpack.c.l.b16 %v1292
        %v1313 = vunpack.c.l.b16 %v1293
        %v1314 = vpack.c.b16 %v1311, %v1310
        %v1315 = vpack.c.b16 %v1313, %v1312
        %v1319 = vsel %vm758, %v1286, 0
        %1321 = vmatprep.subr.bf16.mxu0 0
        %1322 = vmatpush1.bf16.msra.mxu0 %v1314
        %1323 = vmatprep.subr.bf16.mxu0 0
        %1324 = vmatpush1.bf16.msra.mxu0 %v1315
        %1325 = vmatprep.subr.bf16.mxu0 0
        %1326 = vmatpush1.bf16.msra.mxu0 0
        %1327 = vmatprep.subr.bf16.mxu0 0
        %1328 = vmatpush1.bf16.msra.mxu0 0
        %1329 = vmatprep.subr.bf16.mxu0 0
        %1330 = vmatpush1.bf16.msra.mxu0 0
        %1331 = vmatprep.subr.bf16.mxu0 0
        %1332 = vmatpush1.bf16.msra.mxu0 0
        %1333 = vmatprep.subr.bf16.mxu0 0
        %1334 = vmatpush1.bf16.msra.mxu0 0
        %1335 = vmatprep.subr.bf16.mxu0 0
        %1336 = vmatpush1.bf16.msra.mxu0 0
        %1337 = vmatprep.subr.bf16.mxu0 0
        %1338 = vmatpush1.bf16.msra.mxu0 0
        %1339 = vmatprep.subr.bf16.mxu0 0
        %1340 = vmatpush1.bf16.msra.mxu0 0
        %1341 = vmatprep.subr.bf16.mxu0 0
        %1342 = vmatpush1.bf16.msra.mxu0 0
        %1343 = vmatprep.subr.bf16.mxu0 0
        %1344 = vmatpush1.bf16.msra.mxu0 0
        %1345 = vmatprep.subr.bf16.mxu0 0
        %1346 = vmatpush1.bf16.msra.mxu0 0
        %1347 = vmatprep.subr.bf16.mxu0 0
        %1348 = vmatpush1.bf16.msra.mxu0 0
        %1349 = vmatprep.subr.bf16.mxu0 0
        %1350 = vmatpush1.bf16.msra.mxu0 0
        %1351 = vmatprep.subr.bf16.mxu0 0
        %1352 = vmatpush1.bf16.msra.mxu0 0
        %1353 = vmatprep.mubr.bf16.mxu0 0
        %1354 = vmatmul.mubr.bf16.gmra.mrb[0].mxu0 %v1319
        %v1355 = vpop.f32.mrb[0].mxu0
        %v1356 = vadd.f32 0.0, %v1355
        %v1357 = vpop.f32.mrb[0].mxu0
        %v1358 = vpop.f32.mrb[0].mxu0
        %v1359 = vadd.f32 0.0, %v1358
        %v1360 = vpop.f32.mrb[0].mxu0
        %1361 = vdwg.mxu0
        %v1366 = vunpack.c.l.b16 %v1294
        %v1367 = vunpack.c.l.b16 %v1295
        %v1368 = vunpack.c.l.b16 %v1296
        %v1369 = vunpack.c.l.b16 %v1297
        %v1370 = vpack.c.b16 %v1367, %v1366
        %v1371 = vpack.c.b16 %v1369, %v1368
        %v1375 = vsel %vm758, %v1287, 0
        %1377 = vmatprep.subr.bf16.mxu0 0
        %1378 = vmatpush1.bf16.msra.mxu0 %v1370
        %1379 = vmatprep.subr.bf16.mxu0 0
        %1380 = vmatpush1.bf16.msra.mxu0 %v1371
        %1381 = vmatprep.subr.bf16.mxu0 0
        %1382 = vmatpush1.bf16.msra.mxu0 0
        %1383 = vmatprep.subr.bf16.mxu0 0
        %1384 = vmatpush1.bf16.msra.mxu0 0
        %1385 = vmatprep.subr.bf16.mxu0 0
        %1386 = vmatpush1.bf16.msra.mxu0 0
        %1387 = vmatprep.subr.bf16.mxu0 0
        %1388 = vmatpush1.bf16.msra.mxu0 0
        %1389 = vmatprep.subr.bf16.mxu0 0
        %1390 = vmatpush1.bf16.msra.mxu0 0
        %1391 = vmatprep.subr.bf16.mxu0 0
        %1392 = vmatpush1.bf16.msra.mxu0 0
        %1393 = vmatprep.subr.bf16.mxu0 0
        %1394 = vmatpush1.bf16.msra.mxu0 0
        %1395 = vmatprep.subr.bf16.mxu0 0
        %1396 = vmatpush1.bf16.msra.mxu0 0
        %1397 = vmatprep.subr.bf16.mxu0 0
        %1398 = vmatpush1.bf16.msra.mxu0 0
        %1399 = vmatprep.subr.bf16.mxu0 0
        %1400 = vmatpush1.bf16.msra.mxu0 0
        %1401 = vmatprep.subr.bf16.mxu0 0
        %1402 = vmatpush1.bf16.msra.mxu0 0
        %1403 = vmatprep.subr.bf16.mxu0 0
        %1404 = vmatpush1.bf16.msra.mxu0 0
        %1405 = vmatprep.subr.bf16.mxu0 0
        %1406 = vmatpush1.bf16.msra.mxu0 0
        %1407 = vmatprep.subr.bf16.mxu0 0
        %1408 = vmatpush1.bf16.msra.mxu0 0
        %1409 = vmatprep.mubr.bf16.mxu0 0
        %1410 = vmatmul.mubr.bf16.gmra.mrb[0].mxu0 %v1375
        %v1411 = vpop.f32.mrb[0].mxu0
        %v1412 = vadd.f32 0.0, %v1411
        %v1413 = vpop.f32.mrb[0].mxu0
        %v1414 = vpop.f32.mrb[0].mxu0
        %v1415 = vadd.f32 0.0, %v1414
        %v1416 = vpop.f32.mrb[0].mxu0
        %1417 = vdwg.mxu0
        %v1422 = vunpack.c.l.b16 %v1298
        %v1423 = vunpack.c.l.b16 %v1299
        %v1424 = vunpack.c.l.b16 %v1300
        %v1425 = vunpack.c.l.b16 %v1301
        %v1426 = vpack.c.b16 %v1423, %v1422
        %v1427 = vpack.c.b16 %v1425, %v1424
        %v1431 = vsel %vm758, %v1288, 0
        %1433 = vmatprep.subr.bf16.mxu0 0
        %1434 = vmatpush1.bf16.msra.mxu0 %v1426
        %1435 = vmatprep.subr.bf16.mxu0 0
        %1436 = vmatpush1.bf16.msra.mxu0 %v1427
        %1437 = vmatprep.subr.bf16.mxu0 0
        %1438 = vmatpush1.bf16.msra.mxu0 0
        %1439 = vmatprep.subr.bf16.mxu0 0
        %1440 = vmatpush1.bf16.msra.mxu0 0
        %1441 = vmatprep.subr.bf16.mxu0 0
        %1442 = vmatpush1.bf16.msra.mxu0 0
        %1443 = vmatprep.subr.bf16.mxu0 0
        %1444 = vmatpush1.bf16.msra.mxu0 0
        %1445 = vmatprep.subr.bf16.mxu0 0
        %1446 = vmatpush1.bf16.msra.mxu0 0
        %1447 = vmatprep.subr.bf16.mxu0 0
        %1448 = vmatpush1.bf16.msra.mxu0 0
        %1449 = vmatprep.subr.bf16.mxu0 0
        %1450 = vmatpush1.bf16.msra.mxu0 0
        %1451 = vmatprep.subr.bf16.mxu0 0
        %1452 = vmatpush1.bf16.msra.mxu0 0
        %1453 = vmatprep.subr.bf16.mxu0 0
        %1454 = vmatpush1.bf16.msra.mxu0 0
        %1455 = vmatprep.subr.bf16.mxu0 0
        %1456 = vmatpush1.bf16.msra.mxu0 0
        %1457 = vmatprep.subr.bf16.mxu0 0
        %1458 = vmatpush1.bf16.msra.mxu0 0
        %1459 = vmatprep.subr.bf16.mxu0 0
        %1460 = vmatpush1.bf16.msra.mxu0 0
        %1461 = vmatprep.subr.bf16.mxu0 0
        %1462 = vmatpush1.bf16.msra.mxu0 0
        %1463 = vmatprep.subr.bf16.mxu0 0
        %1464 = vmatpush1.bf16.msra.mxu0 0
        %1465 = vmatprep.mubr.bf16.mxu0 0
        %1466 = vmatmul.mubr.bf16.gmra.mrb[0].mxu0 %v1431
        %v1467 = vpop.f32.mrb[0].mxu0
        %v1468 = vadd.f32 0.0, %v1467
        %v1469 = vpop.f32.mrb[0].mxu0
        %v1470 = vpop.f32.mrb[0].mxu0
        %v1471 = vadd.f32 0.0, %v1470
        %v1472 = vpop.f32.mrb[0].mxu0
        %1473 = vdwg.mxu0
        %v1478 = vunpack.c.l.b16 %v1302
        %v1479 = vunpack.c.l.b16 %v1303
        %v1480 = vunpack.c.l.b16 %v1304
        %v1481 = vunpack.c.l.b16 %v1305
        %v1482 = vpack.c.b16 %v1479, %v1478
        %v1483 = vpack.c.b16 %v1481, %v1480
        %v1487 = vsel %vm758, %v1289, 0
        %1489 = vmatprep.subr.bf16.mxu0 0
        %1490 = vmatpush1.bf16.msra.mxu0 %v1482
        %1491 = vmatprep.subr.bf16.mxu0 0
        %1492 = vmatpush1.bf16.msra.mxu0 %v1483
        %1493 = vmatprep.subr.bf16.mxu0 0
        %1494 = vmatpush1.bf16.msra.mxu0 0
        %1495 = vmatprep.subr.bf16.mxu0 0
        %1496 = vmatpush1.bf16.msra.mxu0 0
        %1497 = vmatprep.subr.bf16.mxu0 0
        %1498 = vmatpush1.bf16.msra.mxu0 0
        %1499 = vmatprep.subr.bf16.mxu0 0
        %1500 = vmatpush1.bf16.msra.mxu0 0
        %1501 = vmatprep.subr.bf16.mxu0 0
        %1502 = vmatpush1.bf16.msra.mxu0 0
        %1503 = vmatprep.subr.bf16.mxu0 0
        %1504 = vmatpush1.bf16.msra.mxu0 0
        %1505 = vmatprep.subr.bf16.mxu0 0
        %1506 = vmatpush1.bf16.msra.mxu0 0
        %1507 = vmatprep.subr.bf16.mxu0 0
        %1508 = vmatpush1.bf16.msra.mxu0 0
        %1509 = vmatprep.subr.bf16.mxu0 0
        %1510 = vmatpush1.bf16.msra.mxu0 0
        %1511 = vmatprep.subr.bf16.mxu0 0
        %1512 = vmatpush1.bf16.msra.mxu0 0
        %1513 = vmatprep.subr.bf16.mxu0 0
        %1514 = vmatpush1.bf16.msra.mxu0 0
        %1515 = vmatprep.subr.bf16.mxu0 0
        %1516 = vmatpush1.bf16.msra.mxu0 0
        %1517 = vmatprep.subr.bf16.mxu0 0
        %1518 = vmatpush1.bf16.msra.mxu0 0
        %1519 = vmatprep.subr.bf16.mxu0 0
        %1520 = vmatpush1.bf16.msra.mxu0 0
        %1521 = vmatprep.mubr.bf16.mxu0 0
        %1522 = vmatmul.mubr.bf16.gmra.mrb[0].mxu0 %v1487
        %v1523 = vpop.f32.mrb[0].mxu0
        %v1524 = vadd.f32 0.0, %v1523
        %v1525 = vpop.f32.mrb[0].mxu0
        %v1526 = vpop.f32.mrb[0].mxu0
        %v1527 = vadd.f32 0.0, %v1526
        %v1528 = vpop.f32.mrb[0].mxu0
        %1529 = vdwg.mxu0
        %v1530 = vadd.f32 %v1356, %v1412
        %v1531 = vadd.f32 %v1530, %v1468
        %v1532 = vadd.f32 %v1531, %v1524
        %v1533 = vadd.f32 %v1359, %v1415
        %v1534 = vadd.f32 %v1533, %v1471
        %v1535 = vadd.f32 %v1534, %v1527
        %v1536 = vld [vmem:[%s624] sm:$0xff]
        %v1537 = vld [vmem:[%s624 + $0x8] sm:$0xff]
        %v1538 = vadd.f32 %v1536, %v1532
        %v1539 = vadd.f32 %v1537, %v1535
        %v1540 = vld [vmem:[%s6] sm:$0x1]
        %v1541 = vld [vmem:[%s7] sm:$0x1]
        %1542 = vadd.xlane.f32.xlu0 %v1538
        %v1543 = vpop.xlane.xlu0 %1542
        %1544 = vadd.xlane.f32.xlu0 %v1539
        %v1545 = vpop.xlane.xlu0 %1544
        %v1546 = vrcp.pop 128.0
        %v1547 = vmul.f32 %v1543, %v1546
        %v1548 = vmul.f32 %v1545, %v1546
        %v1549 = vsub.f32 %v1538, %v1547
        %v1550 = vsub.f32 %v1539, %v1548
        %v1551 = vmul.f32 %v1549, %v1549
        %v1552 = vmul.f32 %v1550, %v1550
        %1553 = vadd.xlane.f32.xlu0 %v1551
        %v1554 = vpop.xlane.xlu0 %1553
        %1555 = vadd.xlane.f32.xlu0 %v1552
        %v1556 = vpop.xlane.xlu0 %1555
        %v1557 = vmul.f32 %v1554, %v1546
        %v1558 = vmul.f32 %v1556, %v1546
        %v1559 = vadd.f32 %v1557, 1e-05
        %v1560 = vadd.f32 %v1558, 1e-05
        %v1561 = vrsqrt.pop %v1559
        %v1562 = vrsqrt.pop %v1560
        %v1563 = vmul.f32 %v1549, %v1561
        %v1564 = vmul.f32 %v1550, %v1562
        %v1566 = vlaneseq
        %v1567 = vshrl.u32 %v1566, 7
        %v1568 = vsub.s32 0, %v1567
        %v1569 = vrot.slane %v1540, %v1568
        %v1571 = vmul.f32 %v1563, %v1569
        %v1572 = vmul.f32 %v1564, %v1569
        %v1574 = vlaneseq
        %v1575 = vshrl.u32 %v1574, 7
        %v1576 = vsub.s32 0, %v1575
        %v1577 = vrot.slane %v1541, %v1576
        %v1579 = vadd.f32 %v1571, %v1577
        %v1580 = vadd.f32 %v1572, %v1577
        %v1581 = vpack.c.bf16 %v1580, %v1579
        %v1582 = vld [vmem:[#allocation13] sm:$0xff]
        %v1583 = vld [vmem:[#allocation13 + $0x8] sm:$0xff]
        %v1584 = vld [vmem:[#allocation13 + $0x10] sm:$0xff]
        %v1585 = vld [vmem:[#allocation13 + $0x18] sm:$0xff]
        %v1586 = vld [vmem:[#allocation13 + $0x20] sm:$0xff]
        %v1587 = vld [vmem:[#allocation13 + $0x28] sm:$0xff]
        %v1588 = vld [vmem:[#allocation13 + $0x30] sm:$0xff]
        %v1589 = vld [vmem:[#allocation13 + $0x38] sm:$0xff]
        %v1590 = vld [vmem:[#allocation13 + $0x40] sm:$0xff]
        %v1591 = vld [vmem:[#allocation13 + $0x48] sm:$0xff]
        %v1592 = vld [vmem:[#allocation13 + $0x50] sm:$0xff]
        %v1593 = vld [vmem:[#allocation13 + $0x58] sm:$0xff]
        %v1594 = vld [vmem:[#allocation13 + $0x60] sm:$0xff]
        %v1595 = vld [vmem:[#allocation13 + $0x68] sm:$0xff]
        %v1596 = vld [vmem:[#allocation13 + $0x70] sm:$0xff]
        %v1597 = vld [vmem:[#allocation13 + $0x78] sm:$0xff]
        %v1598 = vld [vmem:[#allocation13 + $0x80] sm:$0xff]
        %v1599 = vld [vmem:[#allocation13 + $0x88] sm:$0xff]
        %v1600 = vld [vmem:[#allocation13 + $0x90] sm:$0xff]
        %v1601 = vld [vmem:[#allocation13 + $0x98] sm:$0xff]
        %v1602 = vld [vmem:[#allocation13 + $0xa0] sm:$0xff]
        %v1603 = vld [vmem:[#allocation13 + $0xa8] sm:$0xff]
        %v1604 = vld [vmem:[#allocation13 + $0xb0] sm:$0xff]
        %v1605 = vld [vmem:[#allocation13 + $0xb8] sm:$0xff]
        %v1606 = vld [vmem:[#allocation13 + $0xc0] sm:$0xff]
        %v1607 = vld [vmem:[#allocation13 + $0xc8] sm:$0xff]
        %v1608 = vld [vmem:[#allocation13 + $0xd0] sm:$0xff]
        %v1609 = vld [vmem:[#allocation13 + $0xd8] sm:$0xff]
        %v1610 = vld [vmem:[#allocation13 + $0xe0] sm:$0xff]
        %v1611 = vld [vmem:[#allocation13 + $0xe8] sm:$0xff]
        %v1612 = vld [vmem:[#allocation13 + $0xf0] sm:$0xff]
        %v1613 = vld [vmem:[#allocation13 + $0xf8] sm:$0xff]
        %v1614 = vld [vmem:[%s9] sm:$0xf]
        %v1616 = vlaneseq
        %v1617 = vshrl.u32 %v1616, 7
        %v1618 = vsub.s32 0, %v1617
        %v1619 = vrot.slane %v1614, %v1618
        %v1620 = vlaneseq
        %v1621 = vshrl.u32 %v1620, 7
        %v1622 = vsub.s32 1, %v1621
        %v1623 = vrot.slane %v1614, %v1622
        %v1624 = vlaneseq
        %v1625 = vshrl.u32 %v1624, 7
        %v1626 = vsub.s32 2, %v1625
        %v1627 = vrot.slane %v1614, %v1626
        %v1628 = vlaneseq
        %v1629 = vshrl.u32 %v1628, 7
        %v1630 = vsub.s32 3, %v1629
        %v1631 = vrot.slane %v1614, %v1630
        %v1668 = vunpack.c.l.b16 %v1582
        %v1669 = vunpack.c.h.b16 %v1582
        %v1670 = vunpack.c.l.b16 %v1583
        %v1671 = vunpack.c.h.b16 %v1583
        %v1672 = vunpack.c.l.b16 %v1584
        %v1673 = vunpack.c.h.b16 %v1584
        %v1674 = vunpack.c.l.b16 %v1585
        %v1675 = vunpack.c.h.b16 %v1585
        %v1676 = vunpack.c.l.b16 %v1586
        %v1677 = vunpack.c.h.b16 %v1586
        %v1678 = vunpack.c.l.b16 %v1587
        %v1679 = vunpack.c.h.b16 %v1587
        %v1680 = vunpack.c.l.b16 %v1588
        %v1681 = vunpack.c.h.b16 %v1588
        %v1682 = vunpack.c.l.b16 %v1589
        %v1683 = vunpack.c.h.b16 %v1589
        %v1684 = vunpack.c.l.b16 %v1590
        %v1685 = vunpack.c.h.b16 %v1590
        %v1686 = vunpack.c.l.b16 %v1591
        %v1687 = vunpack.c.h.b16 %v1591
        %v1688 = vunpack.c.l.b16 %v1592
        %v1689 = vunpack.c.h.b16 %v1592
        %v1690 = vunpack.c.l.b16 %v1593
        %v1691 = vunpack.c.h.b16 %v1593
        %v1692 = vunpack.c.l.b16 %v1594
        %v1693 = vunpack.c.h.b16 %v1594
        %v1694 = vunpack.c.l.b16 %v1595
        %v1695 = vunpack.c.h.b16 %v1595
        %v1696 = vunpack.c.l.b16 %v1596
        %v1697 = vunpack.c.h.b16 %v1596
        %v1698 = vunpack.c.l.b16 %v1597
        %v1699 = vunpack.c.h.b16 %v1597
        %v1700 = vunpack.c.l.b16 %v1598
        %v1701 = vunpack.c.h.b16 %v1598
        %v1702 = vunpack.c.l.b16 %v1599
        %v1703 = vunpack.c.h.b16 %v1599
        %v1704 = vunpack.c.l.b16 %v1600
        %v1705 = vunpack.c.h.b16 %v1600
        %v1706 = vunpack.c.l.b16 %v1601
        %v1707 = vunpack.c.h.b16 %v1601
        %v1708 = vunpack.c.l.b16 %v1602
        %v1709 = vunpack.c.h.b16 %v1602
        %v1710 = vunpack.c.l.b16 %v1603
        %v1711 = vunpack.c.h.b16 %v1603
        %v1712 = vunpack.c.l.b16 %v1604
        %v1713 = vunpack.c.h.b16 %v1604
        %v1714 = vunpack.c.l.b16 %v1605
        %v1715 = vunpack.c.h.b16 %v1605
        %v1716 = vunpack.c.l.b16 %v1606
        %v1717 = vunpack.c.h.b16 %v1606
        %v1718 = vunpack.c.l.b16 %v1607
        %v1719 = vunpack.c.h.b16 %v1607
        %v1720 = vunpack.c.l.b16 %v1608
        %v1721 = vunpack.c.h.b16 %v1608
        %v1722 = vunpack.c.l.b16 %v1609
        %v1723 = vunpack.c.h.b16 %v1609
        %v1724 = vunpack.c.l.b16 %v1610
        %v1725 = vunpack.c.h.b16 %v1610
        %v1726 = vunpack.c.l.b16 %v1611
        %v1727 = vunpack.c.h.b16 %v1611
        %v1728 = vunpack.c.l.b16 %v1612
        %v1729 = vunpack.c.h.b16 %v1612
        %v1730 = vunpack.c.l.b16 %v1613
        %v1731 = vunpack.c.h.b16 %v1613
        %v1732 = vpack.c.b16 %v1672, %v1668
        %v1733 = vpack.c.b16 %v1673, %v1669
        %v1734 = vpack.c.b16 %v1674, %v1670
        %v1735 = vpack.c.b16 %v1675, %v1671
        %v1736 = vpack.c.b16 %v1680, %v1676
        %v1737 = vpack.c.b16 %v1681, %v1677
        %v1738 = vpack.c.b16 %v1682, %v1678
        %v1739 = vpack.c.b16 %v1683, %v1679
        %v1740 = vpack.c.b16 %v1688, %v1684
        %v1741 = vpack.c.b16 %v1689, %v1685
        %v1742 = vpack.c.b16 %v1690, %v1686
        %v1743 = vpack.c.b16 %v1691, %v1687
        %v1744 = vpack.c.b16 %v1696, %v1692
        %v1745 = vpack.c.b16 %v1697, %v1693
        %v1746 = vpack.c.b16 %v1698, %v1694
        %v1747 = vpack.c.b16 %v1699, %v1695
        %v1748 = vpack.c.b16 %v1704, %v1700
        %v1749 = vpack.c.b16 %v1705, %v1701
        %v1750 = vpack.c.b16 %v1706, %v1702
        %v1751 = vpack.c.b16 %v1707, %v1703
        %v1752 = vpack.c.b16 %v1712, %v1708
        %v1753 = vpack.c.b16 %v1713, %v1709
        %v1754 = vpack.c.b16 %v1714, %v1710
        %v1755 = vpack.c.b16 %v1715, %v1711
        %v1756 = vpack.c.b16 %v1720, %v1716
        %v1757 = vpack.c.b16 %v1721, %v1717
        %v1758 = vpack.c.b16 %v1722, %v1718
        %v1759 = vpack.c.b16 %v1723, %v1719
        %v1760 = vpack.c.b16 %v1728, %v1724
        %v1761 = vpack.c.b16 %v1729, %v1725
        %v1762 = vpack.c.b16 %v1730, %v1726
        %v1763 = vpack.c.b16 %v1731, %v1727
        %1796 = vmatprep.subr.bf16.mxu0 %v1733
        %1797 = vmatpush1.bf16.msra.mxu0 %v1732
        %1798 = vmatprep.subr.bf16.mxu0 %v1737
        %1799 = vmatpush1.bf16.msra.mxu0 %v1736
        %1800 = vmatprep.subr.bf16.mxu0 %v1741
        %1801 = vmatpush1.bf16.msra.mxu0 %v1740
        %1802 = vmatprep.subr.bf16.mxu0 %v1745
        %1803 = vmatpush1.bf16.msra.mxu0 %v1744
        %1804 = vmatprep.subr.bf16.mxu0 %v1749
        %1805 = vmatpush1.bf16.msra.mxu0 %v1748
        %1806 = vmatprep.subr.bf16.mxu0 %v1753
        %1807 = vmatpush1.bf16.msra.mxu0 %v1752
        %1808 = vmatprep.subr.bf16.mxu0 %v1757
        %1809 = vmatpush1.bf16.msra.mxu0 %v1756
        %1810 = vmatprep.subr.bf16.mxu0 %v1761
        %1811 = vmatpush1.bf16.msra.mxu0 %v1760
        %1812 = vmatprep.subr.bf16.mxu0 0
        %1813 = vmatpush1.bf16.msra.mxu0 0
        %1814 = vmatprep.subr.bf16.mxu0 0
        %1815 = vmatpush1.bf16.msra.mxu0 0
        %1816 = vmatprep.subr.bf16.mxu0 0
        %1817 = vmatpush1.bf16.msra.mxu0 0
        %1818 = vmatprep.subr.bf16.mxu0 0
        %1819 = vmatpush1.bf16.msra.mxu0 0
        %1820 = vmatprep.subr.bf16.mxu0 0
        %1821 = vmatpush1.bf16.msra.mxu0 0
        %1822 = vmatprep.subr.bf16.mxu0 0
        %1823 = vmatpush1.bf16.msra.mxu0 0
        %1824 = vmatprep.subr.bf16.mxu0 0
        %1825 = vmatpush1.bf16.msra.mxu0 0
        %1826 = vmatprep.subr.bf16.mxu0 0
        %1827 = vmatpush1.bf16.msra.mxu0 0
        %1828 = vmatprep.mubr.bf16.mxu0 0
        %1829 = vmatmul.mubr.bf16.gmra.mrb[0].mxu0 %v1581
        %v1830 = vpop.f32.mrb[0].mxu0
        %v1831 = vadd.f32 %v1619, %v1830
        %v1832 = vpop.f32.mrb[0].mxu0
        %v1833 = vadd.f32 %v1623, %v1832
        %v1834 = vpop.f32.mrb[0].mxu0
        %v1835 = vadd.f32 %v1619, %v1834
        %v1836 = vpop.f32.mrb[0].mxu0
        %v1837 = vadd.f32 %v1623, %v1836
        %1838 = vdwg.mxu0
        %1839 = vmatprep.subr.bf16.mxu0 %v1735
        %1840 = vmatpush1.bf16.msra.mxu0 %v1734
        %1841 = vmatprep.subr.bf16.mxu0 %v1739
        %1842 = vmatpush1.bf16.msra.mxu0 %v1738
        %1843 = vmatprep.subr.bf16.mxu0 %v1743
        %1844 = vmatpush1.bf16.msra.mxu0 %v1742
        %1845 = vmatprep.subr.bf16.mxu0 %v1747
        %1846 = vmatpush1.bf16.msra.mxu0 %v1746
        %1847 = vmatprep.subr.bf16.mxu0 %v1751
        %1848 = vmatpush1.bf16.msra.mxu0 %v1750
        %1849 = vmatprep.subr.bf16.mxu0 %v1755
        %1850 = vmatpush1.bf16.msra.mxu0 %v1754
        %1851 = vmatprep.subr.bf16.mxu0 %v1759
        %1852 = vmatpush1.bf16.msra.mxu0 %v1758
        %1853 = vmatprep.subr.bf16.mxu0 %v1763
        %1854 = vmatpush1.bf16.msra.mxu0 %v1762
        %1855 = vmatprep.subr.bf16.mxu0 0
        %1856 = vmatpush1.bf16.msra.mxu0 0
        %1857 = vmatprep.subr.bf16.mxu0 0
        %1858 = vmatpush1.bf16.msra.mxu0 0
        %1859 = vmatprep.subr.bf16.mxu0 0
        %1860 = vmatpush1.bf16.msra.mxu0 0
        %1861 = vmatprep.subr.bf16.mxu0 0
        %1862 = vmatpush1.bf16.msra.mxu0 0
        %1863 = vmatprep.subr.bf16.mxu0 0
        %1864 = vmatpush1.bf16.msra.mxu0 0
        %1865 = vmatprep.subr.bf16.mxu0 0
        %1866 = vmatpush1.bf16.msra.mxu0 0
        %1867 = vmatprep.subr.bf16.mxu0 0
        %1868 = vmatpush1.bf16.msra.mxu0 0
        %1869 = vmatprep.subr.bf16.mxu0 0
        %1870 = vmatpush1.bf16.msra.mxu0 0
        %1871 = vmatprep.mubr.bf16.mxu0 0
        %1872 = vmatmul.mubr.bf16.gmra.mrb[0].mxu0 %v1581
        %v1873 = vpop.f32.mrb[0].mxu0
        %v1874 = vadd.f32 %v1627, %v1873
        %v1875 = vpop.f32.mrb[0].mxu0
        %v1876 = vadd.f32 %v1631, %v1875
        %v1877 = vpop.f32.mrb[0].mxu0
        %v1878 = vadd.f32 %v1627, %v1877
        %v1879 = vpop.f32.mrb[0].mxu0
        %v1880 = vadd.f32 %v1631, %v1879
        %1881 = vdwg.mxu0
        %v1882 = vmax.f32 %v1831, 0.0
        %v1883 = vmax.f32 %v1833, 0.0
        %v1884 = vmax.f32 %v1874, 0.0
        %v1885 = vmax.f32 %v1876, 0.0
        %v1886 = vmax.f32 %v1835, 0.0
        %v1887 = vmax.f32 %v1837, 0.0
        %v1888 = vmax.f32 %v1878, 0.0
        %v1889 = vmax.f32 %v1880, 0.0
        %v1890 = vpack.c.bf16 %v1886, %v1882
        %v1891 = vpack.c.bf16 %v1887, %v1883
        %v1892 = vpack.c.bf16 %v1888, %v1884
        %v1893 = vpack.c.bf16 %v1889, %v1885
        %v1894 = vld [vmem:[#allocation14] sm:$0xf]
        %v1895 = vld [vmem:[#allocation14 + $0x4] sm:$0xf]
        %v1896 = vld [vmem:[#allocation14 + $0x8] sm:$0xf]
        %v1897 = vld [vmem:[#allocation14 + $0xc] sm:$0xf]
        %v1898 = vld [vmem:[#allocation14 + $0x10] sm:$0xf]
        %v1899 = vld [vmem:[#allocation14 + $0x14] sm:$0xf]
        %v1900 = vld [vmem:[#allocation14 + $0x18] sm:$0xf]
        %v1901 = vld [vmem:[#allocation14 + $0x1c] sm:$0xf]
        %v1902 = vld [vmem:[#allocation14 + $0x20] sm:$0xf]
        %v1903 = vld [vmem:[#allocation14 + $0x24] sm:$0xf]
        %v1904 = vld [vmem:[#allocation14 + $0x28] sm:$0xf]
        %v1905 = vld [vmem:[#allocation14 + $0x2c] sm:$0xf]
        %v1906 = vld [vmem:[#allocation14 + $0x30] sm:$0xf]
        %v1907 = vld [vmem:[#allocation14 + $0x34] sm:$0xf]
        %v1908 = vld [vmem:[#allocation14 + $0x38] sm:$0xf]
        %v1909 = vld [vmem:[#allocation14 + $0x3c] sm:$0xf]
        %v1910 = vld [vmem:[#allocation14 + $0x40] sm:$0xf]
        %v1911 = vld [vmem:[#allocation14 + $0x44] sm:$0xf]
        %v1912 = vld [vmem:[#allocation14 + $0x48] sm:$0xf]
        %v1913 = vld [vmem:[#allocation14 + $0x4c] sm:$0xf]
        %v1914 = vld [vmem:[#allocation14 + $0x50] sm:$0xf]
        %v1915 = vld [vmem:[#allocation14 + $0x54] sm:$0xf]
        %v1916 = vld [vmem:[#allocation14 + $0x58] sm:$0xf]
        %v1917 = vld [vmem:[#allocation14 + $0x5c] sm:$0xf]
        %v1918 = vld [vmem:[#allocation14 + $0x60] sm:$0xf]
        %v1919 = vld [vmem:[#allocation14 + $0x64] sm:$0xf]
        %v1920 = vld [vmem:[#allocation14 + $0x68] sm:$0xf]
        %v1921 = vld [vmem:[#allocation14 + $0x6c] sm:$0xf]
        %v1922 = vld [vmem:[#allocation14 + $0x70] sm:$0xf]
        %v1923 = vld [vmem:[#allocation14 + $0x74] sm:$0xf]
        %v1924 = vld [vmem:[#allocation14 + $0x78] sm:$0xf]
        %v1925 = vld [vmem:[#allocation14 + $0x7c] sm:$0xf]
        %v1926 = vld [vmem:[#allocation14 + $0x80] sm:$0xf]
        %v1927 = vld [vmem:[#allocation14 + $0x84] sm:$0xf]
        %v1928 = vld [vmem:[#allocation14 + $0x88] sm:$0xf]
        %v1929 = vld [vmem:[#allocation14 + $0x8c] sm:$0xf]
        %v1930 = vld [vmem:[#allocation14 + $0x90] sm:$0xf]
        %v1931 = vld [vmem:[#allocation14 + $0x94] sm:$0xf]
        %v1932 = vld [vmem:[#allocation14 + $0x98] sm:$0xf]
        %v1933 = vld [vmem:[#allocation14 + $0x9c] sm:$0xf]
        %v1934 = vld [vmem:[#allocation14 + $0xa0] sm:$0xf]
        %v1935 = vld [vmem:[#allocation14 + $0xa4] sm:$0xf]
        %v1936 = vld [vmem:[#allocation14 + $0xa8] sm:$0xf]
        %v1937 = vld [vmem:[#allocation14 + $0xac] sm:$0xf]
        %v1938 = vld [vmem:[#allocation14 + $0xb0] sm:$0xf]
        %v1939 = vld [vmem:[#allocation14 + $0xb4] sm:$0xf]
        %v1940 = vld [vmem:[#allocation14 + $0xb8] sm:$0xf]
        %v1941 = vld [vmem:[#allocation14 + $0xbc] sm:$0xf]
        %v1942 = vld [vmem:[#allocation14 + $0xc0] sm:$0xf]
        %v1943 = vld [vmem:[#allocation14 + $0xc4] sm:$0xf]
        %v1944 = vld [vmem:[#allocation14 + $0xc8] sm:$0xf]
        %v1945 = vld [vmem:[#allocation14 + $0xcc] sm:$0xf]
        %v1946 = vld [vmem:[#allocation14 + $0xd0] sm:$0xf]
        %v1947 = vld [vmem:[#allocation14 + $0xd4] sm:$0xf]
        %v1948 = vld [vmem:[#allocation14 + $0xd8] sm:$0xf]
        %v1949 = vld [vmem:[#allocation14 + $0xdc] sm:$0xf]
        %v1950 = vld [vmem:[#allocation14 + $0xe0] sm:$0xf]
        %v1951 = vld [vmem:[#allocation14 + $0xe4] sm:$0xf]
        %v1952 = vld [vmem:[#allocation14 + $0xe8] sm:$0xf]
        %v1953 = vld [vmem:[#allocation14 + $0xec] sm:$0xf]
        %v1954 = vld [vmem:[#allocation14 + $0xf0] sm:$0xf]
        %v1955 = vld [vmem:[#allocation14 + $0xf4] sm:$0xf]
        %v1956 = vld [vmem:[#allocation14 + $0xf8] sm:$0xf]
        %v1957 = vld [vmem:[#allocation14 + $0xfc] sm:$0xf]
        %v1958 = vld [vmem:[%s11] sm:$0x1]
        %v1960 = vlaneseq
        %v1961 = vshrl.u32 %v1960, 7
        %v1962 = vsub.s32 0, %v1961
        %v1963 = vrot.slane %v1958, %v1962
        %v2029 = vunpack.c.l.b16 %v1894
        %v2030 = vunpack.c.l.b16 %v1895
        %v2031 = vunpack.c.l.b16 %v1896
        %v2032 = vunpack.c.l.b16 %v1897
        %v2033 = vunpack.c.l.b16 %v1898
        %v2034 = vunpack.c.l.b16 %v1899
        %v2035 = vunpack.c.l.b16 %v1900
        %v2036 = vunpack.c.l.b16 %v1901
        %v2037 = vunpack.c.l.b16 %v1902
        %v2038 = vunpack.c.l.b16 %v1903
        %v2039 = vunpack.c.l.b16 %v1904
        %v2040 = vunpack.c.l.b16 %v1905
        %v2041 = vunpack.c.l.b16 %v1906
        %v2042 = vunpack.c.l.b16 %v1907
        %v2043 = vunpack.c.l.b16 %v1908
        %v2044 = vunpack.c.l.b16 %v1909
        %v2045 = vunpack.c.l.b16 %v1910
        %v2046 = vunpack.c.l.b16 %v1911
        %v2047 = vunpack.c.l.b16 %v1912
        %v2048 = vunpack.c.l.b16 %v1913
        %v2049 = vunpack.c.l.b16 %v1914
        %v2050 = vunpack.c.l.b16 %v1915
        %v2051 = vunpack.c.l.b16 %v1916
        %v2052 = vunpack.c.l.b16 %v1917
        %v2053 = vunpack.c.l.b16 %v1918
        %v2054 = vunpack.c.l.b16 %v1919
        %v2055 = vunpack.c.l.b16 %v1920
        %v2056 = vunpack.c.l.b16 %v1921
        %v2057 = vunpack.c.l.b16 %v1922
        %v2058 = vunpack.c.l.b16 %v1923
        %v2059 = vunpack.c.l.b16 %v1924
        %v2060 = vunpack.c.l.b16 %v1925
        %v2061 = vunpack.c.l.b16 %v1926
        %v2062 = vunpack.c.l.b16 %v1927
        %v2063 = vunpack.c.l.b16 %v1928
        %v2064 = vunpack.c.l.b16 %v1929
        %v2065 = vunpack.c.l.b16 %v1930
        %v2066 = vunpack.c.l.b16 %v1931
        %v2067 = vunpack.c.l.b16 %v1932
        %v2068 = vunpack.c.l.b16 %v1933
        %v2069 = vunpack.c.l.b16 %v1934
        %v2070 = vunpack.c.l.b16 %v1935
        %v2071 = vunpack.c.l.b16 %v1936
        %v2072 = vunpack.c.l.b16 %v1937
        %v2073 = vunpack.c.l.b16 %v1938
        %v2074 = vunpack.c.l.b16 %v1939
        %v2075 = vunpack.c.l.b16 %v1940
        %v2076 = vunpack.c.l.b16 %v1941
        %v2077 = vunpack.c.l.b16 %v1942
        %v2078 = vunpack.c.l.b16 %v1943
        %v2079 = vunpack.c.l.b16 %v1944
        %v2080 = vunpack.c.l.b16 %v1945
        %v2081 = vunpack.c.l.b16 %v1946
        %v2082 = vunpack.c.l.b16 %v1947
        %v2083 = vunpack.c.l.b16 %v1948
        %v2084 = vunpack.c.l.b16 %v1949
        %v2085 = vunpack.c.l.b16 %v1950
        %v2086 = vunpack.c.l.b16 %v1951
        %v2087 = vunpack.c.l.b16 %v1952
        %v2088 = vunpack.c.l.b16 %v1953
        %v2089 = vunpack.c.l.b16 %v1954
        %v2090 = vunpack.c.l.b16 %v1955
        %v2091 = vunpack.c.l.b16 %v1956
        %v2092 = vunpack.c.l.b16 %v1957
        %v2093 = vpack.c.b16 %v2030, %v2029
        %v2094 = vpack.c.b16 %v2032, %v2031
        %v2095 = vpack.c.b16 %v2034, %v2033
        %v2096 = vpack.c.b16 %v2036, %v2035
        %v2097 = vpack.c.b16 %v2038, %v2037
        %v2098 = vpack.c.b16 %v2040, %v2039
        %v2099 = vpack.c.b16 %v2042, %v2041
        %v2100 = vpack.c.b16 %v2044, %v2043
        %v2101 = vpack.c.b16 %v2046, %v2045
        %v2102 = vpack.c.b16 %v2048, %v2047
        %v2103 = vpack.c.b16 %v2050, %v2049
        %v2104 = vpack.c.b16 %v2052, %v2051
        %v2105 = vpack.c.b16 %v2054, %v2053
        %v2106 = vpack.c.b16 %v2056, %v2055
        %v2107 = vpack.c.b16 %v2058, %v2057
        %v2108 = vpack.c.b16 %v2060, %v2059
        %v2109 = vpack.c.b16 %v2062, %v2061
        %v2110 = vpack.c.b16 %v2064, %v2063
        %v2111 = vpack.c.b16 %v2066, %v2065
        %v2112 = vpack.c.b16 %v2068, %v2067
        %v2113 = vpack.c.b16 %v2070, %v2069
        %v2114 = vpack.c.b16 %v2072, %v2071
        %v2115 = vpack.c.b16 %v2074, %v2073
        %v2116 = vpack.c.b16 %v2076, %v2075
        %v2117 = vpack.c.b16 %v2078, %v2077
        %v2118 = vpack.c.b16 %v2080, %v2079
        %v2119 = vpack.c.b16 %v2082, %v2081
        %v2120 = vpack.c.b16 %v2084, %v2083
        %v2121 = vpack.c.b16 %v2086, %v2085
        %v2122 = vpack.c.b16 %v2088, %v2087
        %v2123 = vpack.c.b16 %v2090, %v2089
        %v2124 = vpack.c.b16 %v2092, %v2091
        %2157 = vmatprep.subr.bf16.mxu0 0
        %2158 = vmatpush1.bf16.msra.mxu0 %v2093
        %2159 = vmatprep.subr.bf16.mxu0 0
        %2160 = vmatpush1.bf16.msra.mxu0 %v2094
        %2161 = vmatprep.subr.bf16.mxu0 0
        %2162 = vmatpush1.bf16.msra.mxu0 %v2095
        %2163 = vmatprep.subr.bf16.mxu0 0
        %2164 = vmatpush1.bf16.msra.mxu0 %v2096
        %2165 = vmatprep.subr.bf16.mxu0 0
        %2166 = vmatpush1.bf16.msra.mxu0 %v2097
        %2167 = vmatprep.subr.bf16.mxu0 0
        %2168 = vmatpush1.bf16.msra.mxu0 %v2098
        %2169 = vmatprep.subr.bf16.mxu0 0
        %2170 = vmatpush1.bf16.msra.mxu0 %v2099
        %2171 = vmatprep.subr.bf16.mxu0 0
        %2172 = vmatpush1.bf16.msra.mxu0 %v2100
        %2173 = vmatprep.subr.bf16.mxu0 0
        %2174 = vmatpush1.bf16.msra.mxu0 %v2101
        %2175 = vmatprep.subr.bf16.mxu0 0
        %2176 = vmatpush1.bf16.msra.mxu0 %v2102
        %2177 = vmatprep.subr.bf16.mxu0 0
        %2178 = vmatpush1.bf16.msra.mxu0 %v2103
        %2179 = vmatprep.subr.bf16.mxu0 0
        %2180 = vmatpush1.bf16.msra.mxu0 %v2104
        %2181 = vmatprep.subr.bf16.mxu0 0
        %2182 = vmatpush1.bf16.msra.mxu0 %v2105
        %2183 = vmatprep.subr.bf16.mxu0 0
        %2184 = vmatpush1.bf16.msra.mxu0 %v2106
        %2185 = vmatprep.subr.bf16.mxu0 0
        %2186 = vmatpush1.bf16.msra.mxu0 %v2107
        %2187 = vmatprep.subr.bf16.mxu0 0
        %2188 = vmatpush1.bf16.msra.mxu0 %v2108
        %2189 = vmatprep.mubr.bf16.mxu0 %v1891
        %2190 = vmatmul.mubr.bf16.gmra.mrb[0].mxu0 %v1890
        %v2191 = vpop.f32.mrb[0].mxu0
        %v2192 = vadd.f32 %v1963, %v2191
        %v2193 = vpop.f32.mrb[0].mxu0
        %v2194 = vpop.f32.mrb[0].mxu0
        %v2195 = vadd.f32 %v1963, %v2194
        %v2196 = vpop.f32.mrb[0].mxu0
        %2197 = vdwg.mxu0
        %2198 = vmatprep.subr.bf16.mxu0 0
        %2199 = vmatpush1.bf16.msra.mxu0 %v2109
        %2200 = vmatprep.subr.bf16.mxu0 0
        %2201 = vmatpush1.bf16.msra.mxu0 %v2110
        %2202 = vmatprep.subr.bf16.mxu0 0
        %2203 = vmatpush1.bf16.msra.mxu0 %v2111
        %2204 = vmatprep.subr.bf16.mxu0 0
        %2205 = vmatpush1.bf16.msra.mxu0 %v2112
        %2206 = vmatprep.subr.bf16.mxu0 0
        %2207 = vmatpush1.bf16.msra.mxu0 %v2113
        %2208 = vmatprep.subr.bf16.mxu0 0
        %2209 = vmatpush1.bf16.msra.mxu0 %v2114
        %2210 = vmatprep.subr.bf16.mxu0 0
        %2211 = vmatpush1.bf16.msra.mxu0 %v2115
        %2212 = vmatprep.subr.bf16.mxu0 0
        %2213 = vmatpush1.bf16.msra.mxu0 %v2116
        %2214 = vmatprep.subr.bf16.mxu0 0
        %2215 = vmatpush1.bf16.msra.mxu0 %v2117
        %2216 = vmatprep.subr.bf16.mxu0 0
        %2217 = vmatpush1.bf16.msra.mxu0 %v2118
        %2218 = vmatprep.subr.bf16.mxu0 0
        %2219 = vmatpush1.bf16.msra.mxu0 %v2119
        %2220 = vmatprep.subr.bf16.mxu0 0
        %2221 = vmatpush1.bf16.msra.mxu0 %v2120
        %2222 = vmatprep.subr.bf16.mxu0 0
        %2223 = vmatpush1.bf16.msra.mxu0 %v2121
        %2224 = vmatprep.subr.bf16.mxu0 0
        %2225 = vmatpush1.bf16.msra.mxu0 %v2122
        %2226 = vmatprep.subr.bf16.mxu0 0
        %2227 = vmatpush1.bf16.msra.mxu0 %v2123
        %2228 = vmatprep.subr.bf16.mxu0 0
        %2229 = vmatpush1.bf16.msra.mxu0 %v2124
        %2230 = vmatprep.mubr.bf16.mxu0 %v1893
        %2231 = vmatmul.mubr.bf16.gmra.mrb[0].mxu0 %v1892
        %v2232 = vpop.f32.mrb[0].mxu0
        %v2233 = vadd.f32 %v2192, %v2232
        %v2234 = vpop.f32.mrb[0].mxu0
        %v2235 = vpop.f32.mrb[0].mxu0
        %v2236 = vadd.f32 %v2195, %v2235
        %v2237 = vpop.f32.mrb[0].mxu0
        %2238 = vdwg.mxu0
        %v2239 = vadd.f32 %v1579, %v2233
        %v2240 = vadd.f32 %v1580, %v2236
        %v2241 = vld [vmem:[%s12] sm:$0x1]
        %v2242 = vld [vmem:[%s13] sm:$0x1]
        %2243 = vadd.xlane.f32.xlu0 %v2239
        %v2244 = vpop.xlane.xlu0 %2243
        %2245 = vadd.xlane.f32.xlu0 %v2240
        %v2246 = vpop.xlane.xlu0 %2245
        %v2247 = vmul.f32 %v2244, %v1546
        %v2248 = vmul.f32 %v2246, %v1546
        %v2249 = vsub.f32 %v2239, %v2247
        %v2250 = vsub.f32 %v2240, %v2248
        %v2251 = vmul.f32 %v2249, %v2249
        %v2252 = vmul.f32 %v2250, %v2250
        %2253 = vadd.xlane.f32.xlu0 %v2251
        %v2254 = vpop.xlane.xlu0 %2253
        %2255 = vadd.xlane.f32.xlu0 %v2252
        %v2256 = vpop.xlane.xlu0 %2255
        %v2257 = vmul.f32 %v2254, %v1546
        %v2258 = vmul.f32 %v2256, %v1546
        %v2259 = vadd.f32 %v2257, 1e-05
        %v2260 = vadd.f32 %v2258, 1e-05
        %v2261 = vrsqrt.pop %v2259
        %v2262 = vrsqrt.pop %v2260
        %v2263 = vmul.f32 %v2249, %v2261
        %v2264 = vmul.f32 %v2250, %v2262
        %v2266 = vlaneseq
        %v2267 = vshrl.u32 %v2266, 7
        %v2268 = vsub.s32 0, %v2267
        %v2269 = vrot.slane %v2241, %v2268
        %v2271 = vmul.f32 %v2263, %v2269
        %v2272 = vmul.f32 %v2264, %v2269
        %v2274 = vlaneseq
        %v2275 = vshrl.u32 %v2274, 7
        %v2276 = vsub.s32 0, %v2275
        %v2277 = vrot.slane %v2242, %v2276
        %v2279 = vadd.f32 %v2271, %v2277
        %v2280 = vadd.f32 %v2272, %v2277
        %2281 = vst [vmem:[%s709] sm:$0xff] %v2279
        %2282 = vst [vmem:[%s709 + $0x8] sm:$0xff] %v2280
        %s2283 = sand.u32 %s386, 1
        %s2284 = scalar_lea.sflag [#allocation4], %s2283
        %s2285 = sand.u32 %s386, 1
        %s2286 = smul.addr %s2285, 16
        %s2287 = scalar_lea.vmem [#allocation16], %s2286
        // Predicated region
        $region109: #{tpu_custom_call.1} parent=75 // pred_check
          %p2288 = pneg %p396
        $region110: #{tpu_custom_call.1} parent=75 // pred_check_branch
          %2290 = sbr.rel (%p2288) target = $region112
        $region111: #{tpu_custom_call.1} parent=75 // pred_region
          %s2291 = smul.u32 2, %s44
          %s2293 = ssub.s32 256, 256
          %2294 = vsyncadd %s2284, %s2293
          %s2295 = smul.addr %s43, 2
          %s2296 = sadd.s32 %s2291, %s2295
          %s2297 = smul.addr %s2296, 128
          %s2298 = scalar_lea.hbm %s14, %s2297
          %s2299 = sshll.u32 %s2287, 4
          %s2300 = int_to_ptr.vmem [resolvable:$true] %s2299
          %2305 = dma.vmem_to_hbm [thread:$0]  %s2300, 256, %s2298, %s2284, 128, 128, 8
        $region112: #{tpu_custom_call.1} parent=75 // pred_fallthru
          _
      $region76: #{tpu_custom_call.1} parent=5 // pred_fallthru
        _
      %p2306 = scmp.le.s32.totalorder 2, %s34
      // Predicated region
      $region113: #{tpu_custom_call.1} parent=5 // pred_check
        %p2307 = pneg %p2306
      $region114: #{tpu_custom_call.1} parent=5 // pred_check_branch
        %2309 = sbr.rel (%p2307) target = $region116
      $region115: #{tpu_custom_call.1} parent=5 // pred_region
        %s2310 = ssub.s32 %s34, 2
        // Predicated region
        $region117: #{tpu_custom_call.1} parent=115 // pred_check
          %p2311 = pneg %p402
        $region118: #{tpu_custom_call.1} parent=115 // pred_check_branch
          %2313 = sbr.rel (%p2311) target = $region120
        $region119: #{tpu_custom_call.1} parent=115 // pred_region
          %s2314 = sand.u32 %s387, 1
          %s2315 = scalar_lea.sflag [#allocation4], %s2314
          %s2316 = sand.u32 %s387, 1
          %s2317 = smul.addr %s2316, 16
          %s2318 = scalar_lea.vmem [#allocation16], %s2317
          %2319 = dma.done %s2315, 256
        $region120: #{tpu_custom_call.1} parent=115 // pred_fallthru
          _
      $region116: #{tpu_custom_call.1} parent=5 // pred_fallthru
        _
    $region6: #{tpu_custom_call.1} parent=1 // loop_footer
      %s38 = sadd.s32 1, %s34
    $region7: #{tpu_custom_call.1} parent=1 // loop_footer_branch
      %33 = sbr.rel target = $region3
    $region8: #{tpu_custom_call.1} parent=1 // loop_exit
      _
    %2320 = vsyncpa [#allocation3], 1
    %s2321 = scalar_lea.sflag [#allocation3], 1
    %2322 = vsyncpa %s2321, 1
    %2323 = vsyncpa [#allocation6], 1
    %s2324 = scalar_lea.sflag [#allocation6], 1
    %2325 = vsyncpa %s2324, 1
    %2326 = vsyncpa [#allocation9], 1
    %s2327 = scalar_lea.sflag [#allocation9], 1
    %2328 = vsyncpa %s2327, 1
    %2329 = vsyncpa [#allocation12], 1
    %2330 = vsyncpa [#allocation15], 1
    %2331 = vsyncpa [#allocation4], 1
    %s2332 = scalar_lea.sflag [#allocation4], 1
    %2333 = vsyncpa %s2332, 1

</llo_original>
